<compile_context>
chip_gen: v5e
topology: v5e:2x2
jax: 0.10.0
libtpu: 0.0.40
codegen_flags: <defaults>
</compile_context>

<pallas_src>
import functools

import jax
import jax.numpy as jnp
from jax import lax
from jax.experimental import pallas as pl
from jax.experimental.pallas import tpu as pltpu

_LANE = 128


def _round_up(n, m):
    return ((n + m - 1) // m) * m


def _default_tuning():
    """Per-generation defaults (block size, scoped VMEM, activation dtype)."""
    try:
        kind = jax.devices()[0].device_kind.lower()
    except Exception:
        kind = ""
    if any(t in kind for t in ("v2", "v3", "v4", "v5")):
        # v5e and older: no bf16 VALU -> keep f32 activations; 128 MiB physical
        # VMEM so a 64 MiB scoped limit is safe.
        return {"block_batch": 4096, "vmem_limit_bytes": 64 * 1024 * 1024,
                "bf16_act": False}
    if "v6" in kind or "trillium" in kind:
        return {"block_batch": 8192, "vmem_limit_bytes": 64 * 1024 * 1024,
                "bf16_act": True}
    # v7x / unknown: only 64 MiB VMEM per TensorCore -> stay conservative.
    return {"block_batch": 4096, "vmem_limit_bytes": 48 * 1024 * 1024,
            "bf16_act": True}


def _critic_kernel(x_ref, w1_ref, b1_ref, w2_ref, b2_ref, w3_ref, b3_ref,
                   o_ref, *, bf16_act):
    """One batch tile.

    x_ref : (TB, Dp) f32   input tile in natural (batch, feature) layout
    w1_ref: (H1, Dp) bf16  layer-1 weight (PyTorch (out, in) layout)
    b1_ref: (H1, 1)  f32
    w2_ref: (H2, H1) bf16
    b2_ref: (H2, 1)  f32
    w3_ref: (H2, 1)  f32   layer-3 weight as a column (used on the VPU)
    b3_ref: (1, 1)   f32
    o_ref : (1, TB)  f32   lane-dense output tile (batch on lanes)
    """
    xt = x_ref[...].astype(jnp.bfloat16)                     # cast in-kernel

    # Layer 1 on the MXU: contract the feature axis of BOTH operands,
    #   (H1, Dp) . (TB, Dp)^T -> (H1, TB)   (feature-major, batch on lanes).
    h1 = lax.dot_general(w1_ref[...], xt,
                         dimension_numbers=(((1,), (1,)), ((), ())),
                         preferred_element_type=jnp.float32)
    if bf16_act:
        h1 = h1.astype(jnp.bfloat16) + b1_ref[...].astype(jnp.bfloat16)
    else:
        h1 = h1 + b1_ref[...]
    h1 = jnp.maximum(h1, 0.2 * h1)                           # LeakyReLU(0.2)

    # Layer 2: (H2, H1) @ (H1, TB) -> (H2, TB), f32 accumulation.
    h2 = jnp.dot(w2_ref[...], h1.astype(jnp.bfloat16),
                 preferred_element_type=jnp.float32)
    if bf16_act:
        h2 = h2.astype(jnp.bfloat16) + b2_ref[...].astype(jnp.bfloat16)
    else:
        h2 = h2 + b2_ref[...]
    h2 = jnp.maximum(h2, 0.2 * h2)

    # Layer 3 (128 -> 1): VPU multiply + sublane (XLU) reduce in f32; the
    # result is naturally lane-dense with shape (1, TB).
    out = jnp.sum(h2.astype(jnp.float32) * w3_ref[...],
                  axis=0, keepdims=True) + b3_ref[...]
    o_ref[...] = out.astype(o_ref.dtype)


def prepare_critic_params(params):
    """One-time relayout / cast of PyTorch-layout params for the kernel."""
    w1, b1 = params["w1"], params["b1"]
    w2, b2 = params["w2"], params["b2"]
    w3, b3 = params["w3"], params["b3"]
    H1, D = w1.shape
    H2 = w2.shape[0]
    Dp = _round_up(D, 8)                 # sublane/packing granularity only
    return {
        "D": D, "Dp": Dp, "H1": H1, "H2": H2,
        "w1": jnp.pad(w1, ((0, 0), (0, Dp - D))).astype(jnp.bfloat16),  # (H1, Dp)
        "b1": b1.reshape(H1, 1).astype(jnp.float32),
        "w2": w2.astype(jnp.bfloat16),                                   # (H2, H1)
        "b2": b2.reshape(H2, 1).astype(jnp.float32),
        "w3": w3.reshape(H2, 1).astype(jnp.float32),
        "b3": b3.reshape(1, 1).astype(jnp.float32),
    }


def critic_forward(x, prep, *, block_batch=None, vmem_limit_bytes=None,
                   bf16_act=None):
    """x: (B, input_dim) float32.  prep: output of prepare_critic_params."""
    defaults = _default_tuning()
    if block_batch is None:
        block_batch = defaults["block_batch"]
    if vmem_limit_bytes is None:
        vmem_limit_bytes = defaults["vmem_limit_bytes"]
    if bf16_act is None:
        bf16_act = defaults["bf16_act"]

    B, D = x.shape
    Dp, H1, H2 = prep["Dp"], prep["H1"], prep["H2"]
    assert D == prep["D"]

    # Batch tile: multiple of 128 lanes; clamp so the grid has >= 2 steps when
    # the batch allows it (megacore split on v7x + DMA/compute overlap).
    TB = _round_up(max(min(block_batch, B), 1), _LANE)
    if B > _LANE:
        TB = min(TB, _round_up((B + 1) // 2, _LANE))
    B_pad = _round_up(B, TB)

    # x stays in its natural (batch, feature) layout; the pad is a no-op (and
    # elided by XLA) whenever B and D already line up.
    x_in = x
    if (B_pad != B) or (Dp != D):
        x_in = jnp.pad(x, ((0, B_pad - B), (0, Dp - D)))

    grid = (B_pad // TB,)
    const = lambda shape: pl.BlockSpec(shape, lambda i: (0, 0))  # VMEM-resident

    kernel = functools.partial(_critic_kernel, bf16_act=bf16_act)

    out_t = pl.pallas_call(
        kernel,
        out_shape=jax.ShapeDtypeStruct((1, B_pad), jnp.float32),
        grid=grid,
        in_specs=[
            pl.BlockSpec((TB, Dp), lambda i: (i, 0)),   # streamed x tiles
            const((H1, Dp)), const((H1, 1)),            # layer 1
            const((H2, H1)), const((H2, 1)),            # layer 2
            const((H2, 1)), const((1, 1)),              # layer 3
        ],
        out_specs=pl.BlockSpec((1, TB), lambda i: (0, i)),
        compiler_params=pltpu.CompilerParams(
            dimension_semantics=("parallel",),           # megacore split on v7x
            vmem_limit_bytes=vmem_limit_bytes,
        ),
    )(x_in, prep["w1"], prep["b1"], prep["w2"], prep["b2"],
      prep["w3"], prep["b3"])

    # (1, B_pad) lane-dense slab -> (B, 1), dropping batch padding.
    return out_t.reshape(B_pad, 1)[:B]


def init_critic_params(key, input_dim):
    """PyTorch-layout params: weight (out, in), bias (out,), nn.Linear default
    U(-1/sqrt(fan_in), 1/sqrt(fan_in)) init."""
    dims = [(input_dim, 256), (256, 128), (128, 1)]
    params = {}
    for idx, (fan_in, fan_out) in enumerate(dims, start=1):
        key, kw, kb = jax.random.split(key, 3)
        bound = 1.0 / jnp.sqrt(jnp.float32(fan_in))
        params[f"w{idx}"] = jax.random.uniform(
            kw, (fan_out, fan_in), jnp.float32, minval=-bound, maxval=bound)
        params[f"b{idx}"] = jax.random.uniform(
            kb, (fan_out,), jnp.float32, minval=-bound, maxval=bound)
    return params


def critic_reference(x, params):
    """Pure-JAX f32 reference matching the PyTorch forward (y = x @ W.T + b)."""
    h = jnp.dot(x, params["w1"].T) + params["b1"]
    h = jnp.where(h > 0, h, 0.2 * h)
    h = jnp.dot(h, params["w2"].T) + params["b2"]
    h = jnp.where(h > 0, h, 0.2 * h)
    return jnp.dot(h, params["w3"].T) + params["b3"]


if __name__ == "__main__":
    key = jax.random.PRNGKey(0)
    k_params, k_x = jax.random.split(key)

    batch, input_dim = 512, 64
    params = init_critic_params(k_params, input_dim)
    x = jax.random.normal(k_x, (batch, input_dim), jnp.float32)

    prep = prepare_critic_params(params)

    # Small block so the smoke test exercises a multi-step (pipelined) grid.
    out = critic_forward(x, prep, block_batch=128)
    out = jax.block_until_ready(out)

    ref = critic_reference(x, params)
    assert out.shape == (batch, 1), out.shape
    # bf16 MXU operands (and bf16 activations on v6e/v7x) with f32 accumulation
    # -> loosened tolerance vs. the f32 reference.
    err = float(jnp.max(jnp.abs(out - ref)))
    assert err < 3e-2, err

    print("KERNEL_OK")
</pallas_src>

<mosaic_0001>
module attributes {stable_mosaic.version = 11 : i64} {
  func.func @_critic_kernel(%arg0: i32, %arg1: memref<128x64xf32, #tpu.memory_space<vmem>>, %arg2: memref<256x64xbf16, #tpu.memory_space<vmem>>, %arg3: memref<256x1xf32, #tpu.memory_space<vmem>>, %arg4: memref<128x256xbf16, #tpu.memory_space<vmem>>, %arg5: memref<128x1xf32, #tpu.memory_space<vmem>>, %arg6: memref<128x1xf32, #tpu.memory_space<vmem>>, %arg7: memref<1x1xf32, #tpu.memory_space<vmem>>, %arg8: memref<1x128xf32, #tpu.memory_space<vmem>>) attributes {dimension_semantics = [#tpu.dimension_semantics<parallel>], iteration_bounds = array<i64: 4>, scalar_prefetch = 0 : i64, scratch_operands = 0 : i64, tpu.core_type = #tpu.core_type<tc>, window_params = [{transform_indices = @transform_0, window_bounds = array<i64: 128, 64>}, {pipeline_mode = #tpu.pipeline_mode<synchronous>, transform_indices = @transform_1, window_bounds = array<i64: 256, 64>}, {pipeline_mode = #tpu.pipeline_mode<synchronous>, transform_indices = @transform_2, window_bounds = array<i64: 256, 1>}, {pipeline_mode = #tpu.pipeline_mode<synchronous>, transform_indices = @transform_3, window_bounds = array<i64: 128, 256>}, {pipeline_mode = #tpu.pipeline_mode<synchronous>, transform_indices = @transform_4, window_bounds = array<i64: 128, 1>}, {pipeline_mode = #tpu.pipeline_mode<synchronous>, transform_indices = @transform_5, window_bounds = array<i64: 128, 1>}, {pipeline_mode = #tpu.pipeline_mode<synchronous>, transform_indices = @transform_6, window_bounds = array<i64: 1, 1>}, {transform_indices = @transform_7, window_bounds = array<i64: 1, 128>}]} {
    %c0 = arith.constant 0 : index
    %c0_0 = arith.constant 0 : index
    %0 = vector.load %arg1[%c0, %c0_0] : memref<128x64xf32, #tpu.memory_space<vmem>>, vector<128x64xf32>
    %1 = arith.truncf %0 : vector<128x64xf32> to vector<128x64xbf16>
    %c0_1 = arith.constant 0 : index
    %c0_2 = arith.constant 0 : index
    %2 = vector.load %arg2[%c0_1, %c0_2] : memref<256x64xbf16, #tpu.memory_space<vmem>>, vector<256x64xbf16>
    %cst = arith.constant dense<0.000000e+00> : vector<256x128xf32>
    %3 = tpu.matmul %2, %1, %cst {dimension_numbers = #tpu.dot_dimension_numbers<[1], [1], [0], [0], [0, 0, 1, 0], [], []>} : vector<256x64xbf16>, vector<128x64xbf16>, vector<256x128xf32> -> vector<256x128xf32>
    %4 = arith.truncf %3 : vector<256x128xf32> to vector<256x128xbf16>
    %c0_3 = arith.constant 0 : index
    %c0_4 = arith.constant 0 : index
    %5 = vector.load %arg3[%c0_3, %c0_4] : memref<256x1xf32, #tpu.memory_space<vmem>>, vector<256x1xf32>
    %6 = arith.truncf %5 : vector<256x1xf32> to vector<256x1xbf16>
    %7 = vector.broadcast %6 : vector<256x1xbf16> to vector<256x128xbf16>
    %8 = arith.addf %4, %7 : vector<256x128xbf16>
    %cst_5 = arith.constant 2.001950e-01 : bf16
    %9 = vector.broadcast %cst_5 : bf16 to vector<256x128xbf16>
    %10 = arith.mulf %9, %8 : vector<256x128xbf16>
    %11 = arith.maximumf %8, %10 : vector<256x128xbf16>
    %c0_6 = arith.constant 0 : index
    %c0_7 = arith.constant 0 : index
    %12 = vector.load %arg4[%c0_6, %c0_7] : memref<128x256xbf16, #tpu.memory_space<vmem>>, vector<128x256xbf16>
    %cst_8 = arith.constant dense<0.000000e+00> : vector<128x128xf32>
    %13 = tpu.matmul %12, %11, %cst_8 {dimension_numbers = #tpu.dot_dimension_numbers<[1], [0], [0], [1], [0, 0, 1, 1], [], []>} : vector<128x256xbf16>, vector<256x128xbf16>, vector<128x128xf32> -> vector<128x128xf32>
    %14 = arith.truncf %13 : vector<128x128xf32> to vector<128x128xbf16>
    %c0_9 = arith.constant 0 : index
    %c0_10 = arith.constant 0 : index
    %15 = vector.load %arg5[%c0_9, %c0_10] : memref<128x1xf32, #tpu.memory_space<vmem>>, vector<128x1xf32>
    %16 = arith.truncf %15 : vector<128x1xf32> to vector<128x1xbf16>
    %17 = vector.broadcast %16 : vector<128x1xbf16> to vector<128x128xbf16>
    %18 = arith.addf %14, %17 : vector<128x128xbf16>
    %cst_11 = arith.constant 2.001950e-01 : bf16
    %19 = vector.broadcast %cst_11 : bf16 to vector<128x128xbf16>
    %20 = arith.mulf %19, %18 : vector<128x128xbf16>
    %21 = arith.maximumf %18, %20 : vector<128x128xbf16>
    %22 = arith.extf %21 : vector<128x128xbf16> to vector<128x128xf32>
    %c0_12 = arith.constant 0 : index
    %c0_13 = arith.constant 0 : index
    %23 = vector.load %arg6[%c0_12, %c0_13] : memref<128x1xf32, #tpu.memory_space<vmem>>, vector<128x1xf32>
    %24 = vector.broadcast %23 : vector<128x1xf32> to vector<128x128xf32>
    %25 = arith.mulf %22, %24 : vector<128x128xf32>
    %cst_14 = arith.constant dense<0.000000e+00> : vector<128xf32>
    %26 = vector.multi_reduction <add>, %25, %cst_14 [0] : vector<128x128xf32> to vector<128xf32>
    %27 = vector.shape_cast %26 : vector<128xf32> to vector<1x128xf32>
    %c0_15 = arith.constant 0 : index
    %c0_16 = arith.constant 0 : index
    %28 = vector.load %arg7[%c0_15, %c0_16] : memref<1x1xf32, #tpu.memory_space<vmem>>, vector<1x1xf32>
    %29 = vector.broadcast %28 : vector<1x1xf32> to vector<1x128xf32>
    %30 = arith.addf %27, %29 : vector<1x128xf32>
    %c0_17 = arith.constant 0 : index
    %c0_18 = arith.constant 0 : index
    %31 = vector.load %arg8[%c0_17, %c0_18] : memref<1x128xf32, #tpu.memory_space<vmem>>, vector<1x128xf32>
    tpu.vector_store %arg8[%c0_17, %c0_18], %30 {strides = array<i32>} : memref<1x128xf32, #tpu.memory_space<vmem>>, vector<1x128xf32>,
    return
  }
  func.func @transform_0(%arg0: i32) -> (i32, i32) {
    %c0_i32 = arith.constant 0 : i32
    %c0_i32_0 = arith.constant 0 : i32
    return %arg0, %c0_i32 : i32, i32
  }
  func.func @transform_1(%arg0: i32) -> (i32, i32) {
    %c0_i32 = arith.constant 0 : i32
    %c0_i32_0 = arith.constant 0 : i32
    %c0_i32_1 = arith.constant 0 : i32
    return %c0_i32, %c0_i32_0 : i32, i32
  }
  func.func @transform_2(%arg0: i32) -> (i32, i32) {
    %c0_i32 = arith.constant 0 : i32
    %c0_i32_0 = arith.constant 0 : i32
    %c0_i32_1 = arith.constant 0 : i32
    return %c0_i32, %c0_i32_0 : i32, i32
  }
  func.func @transform_3(%arg0: i32) -> (i32, i32) {
    %c0_i32 = arith.constant 0 : i32
    %c0_i32_0 = arith.constant 0 : i32
    %c0_i32_1 = arith.constant 0 : i32
    return %c0_i32, %c0_i32_0 : i32, i32
  }
  func.func @transform_4(%arg0: i32) -> (i32, i32) {
    %c0_i32 = arith.constant 0 : i32
    %c0_i32_0 = arith.constant 0 : i32
    %c0_i32_1 = arith.constant 0 : i32
    return %c0_i32, %c0_i32_0 : i32, i32
  }
  func.func @transform_5(%arg0: i32) -> (i32, i32) {
    %c0_i32 = arith.constant 0 : i32
    %c0_i32_0 = arith.constant 0 : i32
    %c0_i32_1 = arith.constant 0 : i32
    return %c0_i32, %c0_i32_0 : i32, i32
  }
  func.func @transform_6(%arg0: i32) -> (i32, i32) {
    %c0_i32 = arith.constant 0 : i32
    %c0_i32_0 = arith.constant 0 : i32
    %c0_i32_1 = arith.constant 0 : i32
    return %c0_i32, %c0_i32_0 : i32, i32
  }
  func.func @transform_7(%arg0: i32) -> (i32, i32) {
    %c0_i32 = arith.constant 0 : i32
    %c0_i32_0 = arith.constant 0 : i32
    return %c0_i32, %arg0 : i32, i32
  }
}

</mosaic_0001>

<llo_original>
// kernel: tpu_custom_call.1
$region0: #{tpu_custom_call.1}
  #allocation0 [shape = 'u32[]', space=smem, size = 0x4, offset = 0x4, fixed_abs, tag = 'smem constant byte address 0x4 - core index']
  #allocation1 [shape = 'u32[72,128]{1,0:T(1,128)}', space=vmem, size = 0x9000, scoped, tag = 'internal scratch']
  #allocation2 [shape = 'f32[1,1]{1,0:T(1,128)S(1)}', space=vmem, size = 0x200, scoped, tag = 'scoped memory for tpu_custom_call.1']
  %s0 = inlined_call_operand.vmem [shape: f32[512,64], index: 0, kind: input, shape index: {}]
  %s1 = inlined_call_operand.vmem [shape: bf16[256,64], index: 1, kind: input, shape index: {}]
  %s2 = inlined_call_operand.vmem [shape: f32[256,1], index: 2, kind: input, shape index: {}]
  %s3 = inlined_call_operand.vmem [shape: bf16[128,256], index: 3, kind: input, shape index: {}]
  %s4 = inlined_call_operand.vmem [shape: f32[128,1], index: 4, kind: input, shape index: {}]
  %s5 = inlined_call_operand.vmem [shape: f32[128,1], index: 5, kind: input, shape index: {}]
  %s6 = inlined_call_operand.<no memory space> [shape: f32[1,1], index: 6, kind: input, shape index: {}]
  %s7 = inlined_call_operand.hbm [shape: f32[1,512], index: 7, kind: output, shape index: {}]
  %s8 = sld [smem:[#allocation0]]
  $region61: #{tpu_custom_call.1} parent=0
    _
  %s10 = ssub.s32 1, %s8
  %s11 = scalar_select 0, %s10, %s8
  %v12 = vstv %s6
  %13 = vst [vmem:[#allocation2] sm:$0x1] %v12
  $region1: #{tpu_custom_call.1} parent=0
    #allocation3 [shape = 'u8[1024]{0}', space=vmem, size = 0x400, scoped, tag = 'output window, operand 0']
    #allocation4 [shape = 's32[2]{0}', space=sflag, size = 0x8, scoped, tag = 'scoped memory for tpu_custom_call.1']
    %14 = vsyncpa [#allocation4], 0
    %s15 = scalar_lea.sflag [#allocation4], 1
    %16 = vsyncpa %s15, 0
    loop: start=0, step=1, limit=6
    $region2: #{tpu_custom_call.1} parent=1 // loop_pre_header
      _
    $region3: #{tpu_custom_call.1} parent=1 // loop_header
      %s18 = sphi 0, %s22
      %p19 = scmp.ge.s32.totalorder %s18, 6
      %s28 = sphi 0, %s30
      %s31 = sphi 0, %s28
      %s32 = sphi 0, %s31
      %s48 = sphi 0, %s32
      %s52 = sphi 0, %s52
      %s54 = sphi 0, %s52
      %s55 = sphi 0, %s54
      %s69 = sphi 0, %s55
      %s73 = sphi 0, %s73
      %s75 = sphi 0, %s73
      %s76 = sphi 0, %s75
      %s90 = sphi 0, %s76
      %s94 = sphi 0, %s94
      %s96 = sphi 0, %s94
      %s97 = sphi 0, %s96
      %s111 = sphi 0, %s97
      %s115 = sphi 0, %s115
      %s117 = sphi 0, %s115
      %s118 = sphi 0, %s117
      %s132 = sphi 0, %s118
      %s136 = sphi 0, %s136
      %s138 = sphi 0, %s136
      %s139 = sphi 0, %s138
      %s153 = sphi 0, %s139
      %s157 = sphi 0, %s157
      %s159 = sphi 0, %s157
      %s160 = sphi 0, %s159
      %s174 = sphi 0, %s160
      %s180 = sphi 0, %s182
      %s183 = sphi 0, %s180
      %s184 = sphi 0, %s183
      %s200 = sphi 0, %s184
    $region4: #{tpu_custom_call.1} parent=1 // loop_header_branch
      %21 = sbr.rel (%p19) target = $region8
    $region5: #{tpu_custom_call.1} parent=1 // loop_body
      %s23 = ssub.s32 %s18, 1
      %s24 = ssub.s32 %s18, 2
      %s25 = sadd.s32 %s18, 1
      %s26 = ssub.s32 %s18, %s25
      %p27 = scmp.eq.s32.totalorder %s26, 0
      %s29 = sadd.s32 %s28, 1
      %s30 = scalar_select %p27, %s28, %s29
      %p33 = pneg %p27
      %p34 = scmp.eq.s32.totalorder %s18, 3
      %p35 = por %p33, %p34
      %p36 = scmp.ne.s32.totalorder %s28, %s31
      %p37 = scmp.eq.s32.totalorder %s18, 0
      %p38 = por %p36, %p37
      %p39 = scmp.ne.s32.totalorder %s28, %s31
      %p40 = scmp.eq.s32.totalorder %s23, 3
      %p41 = por %p39, %p40
      %p42 = scmp.ne.s32.totalorder %s31, %s32
      %p43 = scmp.eq.s32.totalorder %s23, 0
      %p44 = por %p42, %p43
      %p45 = scmp.ne.s32.totalorder %s31, %s32
      %p46 = scmp.eq.s32.totalorder %s24, 3
      %p47 = por %p45, %p46
      %p49 = scmp.ne.s32.totalorder %s32, %s48
      %p50 = scmp.eq.s32.totalorder %s24, 0
      %p51 = por %p49, %p50
      %s53 = sadd.s32 %s52, 1
      %p56 = scmp.eq.s32.totalorder %s18, 3
      %p57 = scmp.ne.s32.totalorder %s52, %s54
      %p58 = scmp.eq.s32.totalorder %s18, 0
      %p59 = por %p57, %p58
      %p60 = scmp.ne.s32.totalorder %s52, %s54
      %p61 = scmp.eq.s32.totalorder %s23, 3
      %p62 = por %p60, %p61
      %p63 = scmp.ne.s32.totalorder %s54, %s55
      %p64 = scmp.eq.s32.totalorder %s23, 0
      %p65 = por %p63, %p64
      %p66 = scmp.ne.s32.totalorder %s54, %s55
      %p67 = scmp.eq.s32.totalorder %s24, 3
      %p68 = por %p66, %p67
      %p70 = scmp.ne.s32.totalorder %s55, %s69
      %p71 = scmp.eq.s32.totalorder %s24, 0
      %p72 = por %p70, %p71
      %s74 = sadd.s32 %s73, 1
      %p77 = scmp.eq.s32.totalorder %s18, 3
      %p78 = scmp.ne.s32.totalorder %s73, %s75
      %p79 = scmp.eq.s32.totalorder %s18, 0
      %p80 = por %p78, %p79
      %p81 = scmp.ne.s32.totalorder %s73, %s75
      %p82 = scmp.eq.s32.totalorder %s23, 3
      %p83 = por %p81, %p82
      %p84 = scmp.ne.s32.totalorder %s75, %s76
      %p85 = scmp.eq.s32.totalorder %s23, 0
      %p86 = por %p84, %p85
      %p87 = scmp.ne.s32.totalorder %s75, %s76
      %p88 = scmp.eq.s32.totalorder %s24, 3
      %p89 = por %p87, %p88
      %p91 = scmp.ne.s32.totalorder %s76, %s90
      %p92 = scmp.eq.s32.totalorder %s24, 0
      %p93 = por %p91, %p92
      %s95 = sadd.s32 %s94, 1
      %p98 = scmp.eq.s32.totalorder %s18, 3
      %p99 = scmp.ne.s32.totalorder %s94, %s96
      %p100 = scmp.eq.s32.totalorder %s18, 0
      %p101 = por %p99, %p100
      %p102 = scmp.ne.s32.totalorder %s94, %s96
      %p103 = scmp.eq.s32.totalorder %s23, 3
      %p104 = por %p102, %p103
      %p105 = scmp.ne.s32.totalorder %s96, %s97
      %p106 = scmp.eq.s32.totalorder %s23, 0
      %p107 = por %p105, %p106
      %p108 = scmp.ne.s32.totalorder %s96, %s97
      %p109 = scmp.eq.s32.totalorder %s24, 3
      %p110 = por %p108, %p109
      %p112 = scmp.ne.s32.totalorder %s97, %s111
      %p113 = scmp.eq.s32.totalorder %s24, 0
      %p114 = por %p112, %p113
      %s116 = sadd.s32 %s115, 1
      %p119 = scmp.eq.s32.totalorder %s18, 3
      %p120 = scmp.ne.s32.totalorder %s115, %s117
      %p121 = scmp.eq.s32.totalorder %s18, 0
      %p122 = por %p120, %p121
      %p123 = scmp.ne.s32.totalorder %s115, %s117
      %p124 = scmp.eq.s32.totalorder %s23, 3
      %p125 = por %p123, %p124
      %p126 = scmp.ne.s32.totalorder %s117, %s118
      %p127 = scmp.eq.s32.totalorder %s23, 0
      %p128 = por %p126, %p127
      %p129 = scmp.ne.s32.totalorder %s117, %s118
      %p130 = scmp.eq.s32.totalorder %s24, 3
      %p131 = por %p129, %p130
      %p133 = scmp.ne.s32.totalorder %s118, %s132
      %p134 = scmp.eq.s32.totalorder %s24, 0
      %p135 = por %p133, %p134
      %s137 = sadd.s32 %s136, 1
      %p140 = scmp.eq.s32.totalorder %s18, 3
      %p141 = scmp.ne.s32.totalorder %s136, %s138
      %p142 = scmp.eq.s32.totalorder %s18, 0
      %p143 = por %p141, %p142
      %p144 = scmp.ne.s32.totalorder %s136, %s138
      %p145 = scmp.eq.s32.totalorder %s23, 3
      %p146 = por %p144, %p145
      %p147 = scmp.ne.s32.totalorder %s138, %s139
      %p148 = scmp.eq.s32.totalorder %s23, 0
      %p149 = por %p147, %p148
      %p150 = scmp.ne.s32.totalorder %s138, %s139
      %p151 = scmp.eq.s32.totalorder %s24, 3
      %p152 = por %p150, %p151
      %p154 = scmp.ne.s32.totalorder %s139, %s153
      %p155 = scmp.eq.s32.totalorder %s24, 0
      %p156 = por %p154, %p155
      %s158 = sadd.s32 %s157, 1
      %p161 = scmp.eq.s32.totalorder %s18, 3
      %p162 = scmp.ne.s32.totalorder %s157, %s159
      %p163 = scmp.eq.s32.totalorder %s18, 0
      %p164 = por %p162, %p163
      %p165 = scmp.ne.s32.totalorder %s157, %s159
      %p166 = scmp.eq.s32.totalorder %s23, 3
      %p167 = por %p165, %p166
      %p168 = scmp.ne.s32.totalorder %s159, %s160
      %p169 = scmp.eq.s32.totalorder %s23, 0
      %p170 = por %p168, %p169
      %p171 = scmp.ne.s32.totalorder %s159, %s160
      %p172 = scmp.eq.s32.totalorder %s24, 3
      %p173 = por %p171, %p172
      %p175 = scmp.ne.s32.totalorder %s160, %s174
      %p176 = scmp.eq.s32.totalorder %s24, 0
      %p177 = por %p175, %p176
      %s178 = ssub.s32 %s18, %s25
      %p179 = scmp.eq.s32.totalorder %s178, 0
      %s181 = sadd.s32 %s180, 1
      %s182 = scalar_select %p179, %s180, %s181
      %p185 = pneg %p179
      %p186 = scmp.eq.s32.totalorder %s18, 3
      %p187 = por %p185, %p186
      %p188 = scmp.ne.s32.totalorder %s180, %s183
      %p189 = scmp.eq.s32.totalorder %s18, 0
      %p190 = por %p188, %p189
      %p191 = scmp.ne.s32.totalorder %s180, %s183
      %p192 = scmp.eq.s32.totalorder %s23, 3
      %p193 = por %p191, %p192
      %p194 = scmp.ne.s32.totalorder %s183, %s184
      %p195 = scmp.eq.s32.totalorder %s23, 0
      %p196 = por %p194, %p195
      %p197 = scmp.ne.s32.totalorder %s183, %s184
      %p198 = scmp.eq.s32.totalorder %s24, 3
      %p199 = por %p197, %p198
      %p201 = scmp.ne.s32.totalorder %s184, %s200
      %p202 = scmp.eq.s32.totalorder %s24, 0
      %p203 = por %p201, %p202
      %p204 = scmp.le.s32.totalorder 1, %s18
      %p205 = scmp.lt.s32.totalorder %s18, 5
      %p206 = pnand %p204, %p205
      %p207 = pneg %p206
      // Predicated region
      $region9: #{tpu_custom_call.1} parent=5 // pred_check
        _
      $region10: #{tpu_custom_call.1} parent=5 // pred_check_branch
        %209 = sbr.rel (%p206) target = $region12
      $region11: #{tpu_custom_call.1} parent=5 // pred_region
        %s210 = ssub.s32 %s18, 1
        // Predicated region
        $region13: #{tpu_custom_call.1} parent=11 // pred_check
          %p211 = pneg %p65
        $region14: #{tpu_custom_call.1} parent=11 // pred_check_branch
          %213 = sbr.rel (%p211) target = $region16
        $region15: #{tpu_custom_call.1} parent=11 // pred_region
          _
        $region16: #{tpu_custom_call.1} parent=11 // pred_fallthru
          _
        // Predicated region
        $region17: #{tpu_custom_call.1} parent=11 // pred_check
          %p214 = pneg %p86
        $region18: #{tpu_custom_call.1} parent=11 // pred_check_branch
          %216 = sbr.rel (%p214) target = $region20
        $region19: #{tpu_custom_call.1} parent=11 // pred_region
          _
        $region20: #{tpu_custom_call.1} parent=11 // pred_fallthru
          _
        // Predicated region
        $region21: #{tpu_custom_call.1} parent=11 // pred_check
          %p217 = pneg %p107
        $region22: #{tpu_custom_call.1} parent=11 // pred_check_branch
          %219 = sbr.rel (%p217) target = $region24
        $region23: #{tpu_custom_call.1} parent=11 // pred_region
          _
        $region24: #{tpu_custom_call.1} parent=11 // pred_fallthru
          _
        // Predicated region
        $region25: #{tpu_custom_call.1} parent=11 // pred_check
          %p220 = pneg %p128
        $region26: #{tpu_custom_call.1} parent=11 // pred_check_branch
          %222 = sbr.rel (%p220) target = $region28
        $region27: #{tpu_custom_call.1} parent=11 // pred_region
          _
        $region28: #{tpu_custom_call.1} parent=11 // pred_fallthru
          _
        // Predicated region
        $region29: #{tpu_custom_call.1} parent=11 // pred_check
          %p223 = pneg %p149
        $region30: #{tpu_custom_call.1} parent=11 // pred_check_branch
          %225 = sbr.rel (%p223) target = $region32
        $region31: #{tpu_custom_call.1} parent=11 // pred_region
          _
        $region32: #{tpu_custom_call.1} parent=11 // pred_fallthru
          _
        // Predicated region
        $region33: #{tpu_custom_call.1} parent=11 // pred_check
          %p226 = pneg %p170
        $region34: #{tpu_custom_call.1} parent=11 // pred_check_branch
          %228 = sbr.rel (%p226) target = $region36
        $region35: #{tpu_custom_call.1} parent=11 // pred_region
          _
        $region36: #{tpu_custom_call.1} parent=11 // pred_fallthru
          _
      $region12: #{tpu_custom_call.1} parent=5 // pred_fallthru
        _
      %p229 = scmp.lt.s32.totalorder %s18, 4
      // Predicated region
      $region37: #{tpu_custom_call.1} parent=5 // pred_check
        %p230 = pneg %p229
      $region38: #{tpu_custom_call.1} parent=5 // pred_check_branch
        %232 = sbr.rel (%p230) target = $region40
      $region39: #{tpu_custom_call.1} parent=5 // pred_region
        // Predicated region
        $region41: #{tpu_custom_call.1} parent=39 // pred_check
          %p233 = pneg %p38
        $region42: #{tpu_custom_call.1} parent=39 // pred_check_branch
          %235 = sbr.rel (%p233) target = $region44
        $region43: #{tpu_custom_call.1} parent=39 // pred_region
          %s236 = smul.u32 16, %s18
          %p237 = scmp.lt.s32.totalorder %s236, 63
          %s238 = scalar_select %p237, %s236, 63
          %s239 = smul.addr %s238, 8
          %s240 = scalar_lea.vmem %s0, %s239
          %s241 = smul.u32 16, %s18
        $region44: #{tpu_custom_call.1} parent=39 // pred_fallthru
          _
      $region40: #{tpu_custom_call.1} parent=5 // pred_fallthru
        _
      %p242 = scmp.le.s32.totalorder 1, %s18
      %p243 = scmp.lt.s32.totalorder %s18, 5
      %p244 = pnand %p242, %p243
      %p245 = pneg %p244
      // Predicated region
      $region45: #{tpu_custom_call.1} parent=5 // pred_check
        _
      $region46: #{tpu_custom_call.1} parent=5 // pred_check_branch
        %247 = sbr.rel (%p244) target = $region48
      $region47: #{tpu_custom_call.1} parent=5 // pred_region
        %s248 = ssub.s32 %s18, 1
        %s249 = smul.u32 16, %s23
        %p250 = scmp.lt.s32.totalorder %s249, 63
        %s251 = scalar_select %p250, %s249, 63
        %s252 = smul.addr %s251, 8
        %s253 = scalar_lea.vmem %s0, %s252
        %p254 = pneg %p44
        %p255 = pneg %p41
        %p256 = pneg %p65
        %p257 = pneg %p62
        %p258 = pneg %p86
        %p259 = pneg %p83
        %p260 = pneg %p107
        %p261 = pneg %p104
        %p262 = pneg %p128
        %p263 = pneg %p125
        %p264 = pneg %p149
        %p265 = pneg %p146
        %p266 = pneg %p170
        %p267 = pneg %p167
        %p268 = pneg %p196
        %p269 = pneg %p193
        %s270 = sand.u32 %s183, 1
        %s271 = scalar_lea.sflag [#allocation4], %s270
        %s272 = sand.u32 %s183, 1
        %s273 = scalar_lea.vmem [#allocation3], %s272
        %s274 = smul.u32 16, %s23
        %p275 = scmp.lt.s32.totalorder %s274, 63
        %s276 = scalar_select %p275, %s274, 63
        %s277 = smul.addr %s276, 8
        %s278 = scalar_lea.vmem %s0, %s277
        %s279 = smul.u32 16, %s23
        %v280 = vld [vmem:[%s278] sm:$0xff]
        %v281 = vld [vmem:[%s278 + $0x8] sm:$0xff]
        %v282 = vld [vmem:[%s278 + $0x10] sm:$0xff]
        %v283 = vld [vmem:[%s278 + $0x18] sm:$0xff]
        %v284 = vld [vmem:[%s278 + $0x20] sm:$0xff]
        %v285 = vld [vmem:[%s278 + $0x28] sm:$0xff]
        %v286 = vld [vmem:[%s278 + $0x30] sm:$0xff]
        %v287 = vld [vmem:[%s278 + $0x38] sm:$0xff]
        %v288 = vld [vmem:[%s278 + $0x40] sm:$0xff]
        %v289 = vld [vmem:[%s278 + $0x48] sm:$0xff]
        %v290 = vld [vmem:[%s278 + $0x50] sm:$0xff]
        %v291 = vld [vmem:[%s278 + $0x58] sm:$0xff]
        %v292 = vld [vmem:[%s278 + $0x60] sm:$0xff]
        %v293 = vld [vmem:[%s278 + $0x68] sm:$0xff]
        %v294 = vld [vmem:[%s278 + $0x70] sm:$0xff]
        %v295 = vld [vmem:[%s278 + $0x78] sm:$0xff]
        %v296 = vpack.c.bf16 %v281, %v280
        %v297 = vpack.c.bf16 %v283, %v282
        %v298 = vpack.c.bf16 %v285, %v284
        %v299 = vpack.c.bf16 %v287, %v286
        %v300 = vpack.c.bf16 %v289, %v288
        %v301 = vpack.c.bf16 %v291, %v290
        %v302 = vpack.c.bf16 %v293, %v292
        %v303 = vpack.c.bf16 %v295, %v294
        %v304 = vld [vmem:[%s1] sm:$0xf]
        %v305 = vld [vmem:[%s1 + $0x4] sm:$0xf]
        %v306 = vld [vmem:[%s1 + $0x8] sm:$0xf]
        %v307 = vld [vmem:[%s1 + $0xc] sm:$0xf]
        %v308 = vld [vmem:[%s1 + $0x10] sm:$0xf]
        %v309 = vld [vmem:[%s1 + $0x14] sm:$0xf]
        %v310 = vld [vmem:[%s1 + $0x18] sm:$0xf]
        %v311 = vld [vmem:[%s1 + $0x1c] sm:$0xf]
        %v312 = vld [vmem:[%s1 + $0x20] sm:$0xf]
        %v313 = vld [vmem:[%s1 + $0x24] sm:$0xf]
        %v314 = vld [vmem:[%s1 + $0x28] sm:$0xf]
        %v315 = vld [vmem:[%s1 + $0x2c] sm:$0xf]
        %v316 = vld [vmem:[%s1 + $0x30] sm:$0xf]
        %v317 = vld [vmem:[%s1 + $0x34] sm:$0xf]
        %v318 = vld [vmem:[%s1 + $0x38] sm:$0xf]
        %v319 = vld [vmem:[%s1 + $0x3c] sm:$0xf]
        %v320 = vld [vmem:[%s1 + $0x40] sm:$0xf]
        %v321 = vld [vmem:[%s1 + $0x44] sm:$0xf]
        %v322 = vld [vmem:[%s1 + $0x48] sm:$0xf]
        %v323 = vld [vmem:[%s1 + $0x4c] sm:$0xf]
        %v324 = vld [vmem:[%s1 + $0x50] sm:$0xf]
        %v325 = vld [vmem:[%s1 + $0x54] sm:$0xf]
        %v326 = vld [vmem:[%s1 + $0x58] sm:$0xf]
        %v327 = vld [vmem:[%s1 + $0x5c] sm:$0xf]
        %v328 = vld [vmem:[%s1 + $0x60] sm:$0xf]
        %v329 = vld [vmem:[%s1 + $0x64] sm:$0xf]
        %v330 = vld [vmem:[%s1 + $0x68] sm:$0xf]
        %v331 = vld [vmem:[%s1 + $0x6c] sm:$0xf]
        %v332 = vld [vmem:[%s1 + $0x70] sm:$0xf]
        %v333 = vld [vmem:[%s1 + $0x74] sm:$0xf]
        %v334 = vld [vmem:[%s1 + $0x78] sm:$0xf]
        %v335 = vld [vmem:[%s1 + $0x7c] sm:$0xf]
        %v368 = vunpack.c.l.b16 %v304
        %v369 = vunpack.c.l.b16 %v305
        %v370 = vunpack.c.l.b16 %v306
        %v371 = vunpack.c.l.b16 %v307
        %v372 = vunpack.c.l.b16 %v308
        %v373 = vunpack.c.l.b16 %v309
        %v374 = vunpack.c.l.b16 %v310
        %v375 = vunpack.c.l.b16 %v311
        %v376 = vunpack.c.l.b16 %v312
        %v377 = vunpack.c.l.b16 %v313
        %v378 = vunpack.c.l.b16 %v314
        %v379 = vunpack.c.l.b16 %v315
        %v380 = vunpack.c.l.b16 %v316
        %v381 = vunpack.c.l.b16 %v317
        %v382 = vunpack.c.l.b16 %v318
        %v383 = vunpack.c.l.b16 %v319
        %v384 = vunpack.c.l.b16 %v320
        %v385 = vunpack.c.l.b16 %v321
        %v386 = vunpack.c.l.b16 %v322
        %v387 = vunpack.c.l.b16 %v323
        %v388 = vunpack.c.l.b16 %v324
        %v389 = vunpack.c.l.b16 %v325
        %v390 = vunpack.c.l.b16 %v326
        %v391 = vunpack.c.l.b16 %v327
        %v392 = vunpack.c.l.b16 %v328
        %v393 = vunpack.c.l.b16 %v329
        %v394 = vunpack.c.l.b16 %v330
        %v395 = vunpack.c.l.b16 %v331
        %v396 = vunpack.c.l.b16 %v332
        %v397 = vunpack.c.l.b16 %v333
        %v398 = vunpack.c.l.b16 %v334
        %v399 = vunpack.c.l.b16 %v335
        %v400 = vpack.c.b16 %v369, %v368
        %v401 = vpack.c.b16 %v371, %v370
        %v402 = vpack.c.b16 %v373, %v372
        %v403 = vpack.c.b16 %v375, %v374
        %v404 = vpack.c.b16 %v377, %v376
        %v405 = vpack.c.b16 %v379, %v378
        %v406 = vpack.c.b16 %v381, %v380
        %v407 = vpack.c.b16 %v383, %v382
        %v408 = vpack.c.b16 %v385, %v384
        %v409 = vpack.c.b16 %v387, %v386
        %v410 = vpack.c.b16 %v389, %v388
        %v411 = vpack.c.b16 %v391, %v390
        %v412 = vpack.c.b16 %v393, %v392
        %v413 = vpack.c.b16 %v395, %v394
        %v414 = vpack.c.b16 %v397, %v396
        %v415 = vpack.c.b16 %v399, %v398
        %vm416 = vcmask 523264
        %v418 = vsel %vm416, %v400, 0
        %v421 = vsel %vm416, %v401, 0
        %v424 = vsel %vm416, %v402, 0
        %v427 = vsel %vm416, %v403, 0
        %v430 = vsel %vm416, %v404, 0
        %v433 = vsel %vm416, %v405, 0
        %v436 = vsel %vm416, %v406, 0
        %v439 = vsel %vm416, %v407, 0
        %v442 = vsel %vm416, %v408, 0
        %v445 = vsel %vm416, %v409, 0
        %v448 = vsel %vm416, %v410, 0
        %v451 = vsel %vm416, %v411, 0
        %v454 = vsel %vm416, %v412, 0
        %v457 = vsel %vm416, %v413, 0
        %v460 = vsel %vm416, %v414, 0
        %v463 = vsel %vm416, %v415, 0
        %v466 = vsel %vm416, %v296, 0
        %v469 = vsel %vm416, %v297, 0
        %v472 = vsel %vm416, %v298, 0
        %v475 = vsel %vm416, %v299, 0
        %v478 = vsel %vm416, %v300, 0
        %v481 = vsel %vm416, %v301, 0
        %v484 = vsel %vm416, %v302, 0
        %v487 = vsel %vm416, %v303, 0
        %489 = vmatpush.bf16.xpose.msra.mxu0 %v487
        %490 = vmatpush.bf16.xpose.msra.mxu0 %v484
        %491 = vmatpush.bf16.xpose.msra.mxu0 %v481
        %492 = vmatpush.bf16.xpose.msra.mxu0 %v478
        %493 = vmatpush.bf16.xpose.msra.mxu0 %v475
        %494 = vmatpush.bf16.xpose.msra.mxu0 %v472
        %495 = vmatpush.bf16.xpose.msra.mxu0 %v469
        %496 = vmatpush.bf16.xpose.msra.mxu0 %v466
        %497 = vmatmul.bf16.gmra.mxu0 %v418
        %v498 = vpop.f32.mrf.mxu0
        %v499 = vadd.f32 0.0, %v498
        %v500 = vpop.f32.mrf.mxu0
        %v501 = vadd.f32 0.0, %v500
        %502 = vmatmul.bf16.gmra.mxu0 %v421
        %v503 = vpop.f32.mrf.mxu0
        %v504 = vadd.f32 0.0, %v503
        %v505 = vpop.f32.mrf.mxu0
        %v506 = vadd.f32 0.0, %v505
        %507 = vmatmul.bf16.gmra.mxu0 %v424
        %v508 = vpop.f32.mrf.mxu0
        %v509 = vadd.f32 0.0, %v508
        %v510 = vpop.f32.mrf.mxu0
        %v511 = vadd.f32 0.0, %v510
        %512 = vmatmul.bf16.gmra.mxu0 %v427
        %v513 = vpop.f32.mrf.mxu0
        %v514 = vadd.f32 0.0, %v513
        %v515 = vpop.f32.mrf.mxu0
        %v516 = vadd.f32 0.0, %v515
        %517 = vmatmul.bf16.gmra.mxu0 %v430
        %v518 = vpop.f32.mrf.mxu0
        %v519 = vadd.f32 0.0, %v518
        %v520 = vpop.f32.mrf.mxu0
        %v521 = vadd.f32 0.0, %v520
        %522 = vmatmul.bf16.gmra.mxu0 %v433
        %v523 = vpop.f32.mrf.mxu0
        %v524 = vadd.f32 0.0, %v523
        %v525 = vpop.f32.mrf.mxu0
        %v526 = vadd.f32 0.0, %v525
        %527 = vmatmul.bf16.gmra.mxu0 %v436
        %v528 = vpop.f32.mrf.mxu0
        %v529 = vadd.f32 0.0, %v528
        %v530 = vpop.f32.mrf.mxu0
        %v531 = vadd.f32 0.0, %v530
        %532 = vmatmul.bf16.gmra.mxu0 %v439
        %v533 = vpop.f32.mrf.mxu0
        %v534 = vadd.f32 0.0, %v533
        %v535 = vpop.f32.mrf.mxu0
        %v536 = vadd.f32 0.0, %v535
        %537 = vmatmul.bf16.gmra.mxu0 %v442
        %v538 = vpop.f32.mrf.mxu0
        %v539 = vadd.f32 0.0, %v538
        %v540 = vpop.f32.mrf.mxu0
        %v541 = vadd.f32 0.0, %v540
        %542 = vmatmul.bf16.gmra.mxu0 %v445
        %v543 = vpop.f32.mrf.mxu0
        %v544 = vadd.f32 0.0, %v543
        %v545 = vpop.f32.mrf.mxu0
        %v546 = vadd.f32 0.0, %v545
        %547 = vmatmul.bf16.gmra.mxu0 %v448
        %v548 = vpop.f32.mrf.mxu0
        %v549 = vadd.f32 0.0, %v548
        %v550 = vpop.f32.mrf.mxu0
        %v551 = vadd.f32 0.0, %v550
        %552 = vmatmul.bf16.gmra.mxu0 %v451
        %v553 = vpop.f32.mrf.mxu0
        %v554 = vadd.f32 0.0, %v553
        %v555 = vpop.f32.mrf.mxu0
        %v556 = vadd.f32 0.0, %v555
        %557 = vmatmul.bf16.gmra.mxu0 %v454
        %v558 = vpop.f32.mrf.mxu0
        %v559 = vadd.f32 0.0, %v558
        %v560 = vpop.f32.mrf.mxu0
        %v561 = vadd.f32 0.0, %v560
        %562 = vmatmul.bf16.gmra.mxu0 %v457
        %v563 = vpop.f32.mrf.mxu0
        %v564 = vadd.f32 0.0, %v563
        %v565 = vpop.f32.mrf.mxu0
        %v566 = vadd.f32 0.0, %v565
        %567 = vmatmul.bf16.gmra.mxu0 %v460
        %v568 = vpop.f32.mrf.mxu0
        %v569 = vadd.f32 0.0, %v568
        %v570 = vpop.f32.mrf.mxu0
        %v571 = vadd.f32 0.0, %v570
        %572 = vmatmul.bf16.gmra.mxu0 %v463
        %v573 = vpop.f32.mrf.mxu0
        %v574 = vadd.f32 0.0, %v573
        %v575 = vpop.f32.mrf.mxu0
        %v576 = vadd.f32 0.0, %v575
        %577 = vdwg.mxu0
        %v578 = vpack.c.bf16 %v499, %v499
        %v579 = vpack.c.bf16 %v501, %v501
        %v580 = vpack.c.bf16 %v504, %v504
        %v581 = vpack.c.bf16 %v506, %v506
        %v582 = vpack.c.bf16 %v509, %v509
        %v583 = vpack.c.bf16 %v511, %v511
        %v584 = vpack.c.bf16 %v514, %v514
        %v585 = vpack.c.bf16 %v516, %v516
        %v586 = vpack.c.bf16 %v519, %v519
        %v587 = vpack.c.bf16 %v521, %v521
        %v588 = vpack.c.bf16 %v524, %v524
        %v589 = vpack.c.bf16 %v526, %v526
        %v590 = vpack.c.bf16 %v529, %v529
        %v591 = vpack.c.bf16 %v531, %v531
        %v592 = vpack.c.bf16 %v534, %v534
        %v593 = vpack.c.bf16 %v536, %v536
        %v594 = vpack.c.bf16 %v539, %v539
        %v595 = vpack.c.bf16 %v541, %v541
        %v596 = vpack.c.bf16 %v544, %v544
        %v597 = vpack.c.bf16 %v546, %v546
        %v598 = vpack.c.bf16 %v549, %v549
        %v599 = vpack.c.bf16 %v551, %v551
        %v600 = vpack.c.bf16 %v554, %v554
        %v601 = vpack.c.bf16 %v556, %v556
        %v602 = vpack.c.bf16 %v559, %v559
        %v603 = vpack.c.bf16 %v561, %v561
        %v604 = vpack.c.bf16 %v564, %v564
        %v605 = vpack.c.bf16 %v566, %v566
        %v606 = vpack.c.bf16 %v569, %v569
        %v607 = vpack.c.bf16 %v571, %v571
        %v608 = vpack.c.bf16 %v574, %v574
        %v609 = vpack.c.bf16 %v576, %v576
        %v610 = vld [vmem:[%s2] sm:$0xff]
        %v611 = vld [vmem:[%s2 + $0x8] sm:$0xff]
        %v612 = vld [vmem:[%s2 + $0x10] sm:$0xff]
        %v613 = vld [vmem:[%s2 + $0x18] sm:$0xff]
        %v614 = vld [vmem:[%s2 + $0x20] sm:$0xff]
        %v615 = vld [vmem:[%s2 + $0x28] sm:$0xff]
        %v616 = vld [vmem:[%s2 + $0x30] sm:$0xff]
        %v617 = vld [vmem:[%s2 + $0x38] sm:$0xff]
        %v618 = vld [vmem:[%s2 + $0x40] sm:$0xff]
        %v619 = vld [vmem:[%s2 + $0x48] sm:$0xff]
        %v620 = vld [vmem:[%s2 + $0x50] sm:$0xff]
        %v621 = vld [vmem:[%s2 + $0x58] sm:$0xff]
        %v622 = vld [vmem:[%s2 + $0x60] sm:$0xff]
        %v623 = vld [vmem:[%s2 + $0x68] sm:$0xff]
        %v624 = vld [vmem:[%s2 + $0x70] sm:$0xff]
        %v625 = vld [vmem:[%s2 + $0x78] sm:$0xff]
        %v626 = vld [vmem:[%s2 + $0x80] sm:$0xff]
        %v627 = vld [vmem:[%s2 + $0x88] sm:$0xff]
        %v628 = vld [vmem:[%s2 + $0x90] sm:$0xff]
        %v629 = vld [vmem:[%s2 + $0x98] sm:$0xff]
        %v630 = vld [vmem:[%s2 + $0xa0] sm:$0xff]
        %v631 = vld [vmem:[%s2 + $0xa8] sm:$0xff]
        %v632 = vld [vmem:[%s2 + $0xb0] sm:$0xff]
        %v633 = vld [vmem:[%s2 + $0xb8] sm:$0xff]
        %v634 = vld [vmem:[%s2 + $0xc0] sm:$0xff]
        %v635 = vld [vmem:[%s2 + $0xc8] sm:$0xff]
        %v636 = vld [vmem:[%s2 + $0xd0] sm:$0xff]
        %v637 = vld [vmem:[%s2 + $0xd8] sm:$0xff]
        %v638 = vld [vmem:[%s2 + $0xe0] sm:$0xff]
        %v639 = vld [vmem:[%s2 + $0xe8] sm:$0xff]
        %v640 = vld [vmem:[%s2 + $0xf0] sm:$0xff]
        %v641 = vld [vmem:[%s2 + $0xf8] sm:$0xff]
        %v642 = vpack.c.bf16 %v610, %v610
        %v643 = vpack.c.bf16 %v611, %v611
        %v644 = vpack.c.bf16 %v612, %v612
        %v645 = vpack.c.bf16 %v613, %v613
        %v646 = vpack.c.bf16 %v614, %v614
        %v647 = vpack.c.bf16 %v615, %v615
        %v648 = vpack.c.bf16 %v616, %v616
        %v649 = vpack.c.bf16 %v617, %v617
        %v650 = vpack.c.bf16 %v618, %v618
        %v651 = vpack.c.bf16 %v619, %v619
        %v652 = vpack.c.bf16 %v620, %v620
        %v653 = vpack.c.bf16 %v621, %v621
        %v654 = vpack.c.bf16 %v622, %v622
        %v655 = vpack.c.bf16 %v623, %v623
        %v656 = vpack.c.bf16 %v624, %v624
        %v657 = vpack.c.bf16 %v625, %v625
        %v658 = vpack.c.bf16 %v626, %v626
        %v659 = vpack.c.bf16 %v627, %v627
        %v660 = vpack.c.bf16 %v628, %v628
        %v661 = vpack.c.bf16 %v629, %v629
        %v662 = vpack.c.bf16 %v630, %v630
        %v663 = vpack.c.bf16 %v631, %v631
        %v664 = vpack.c.bf16 %v632, %v632
        %v665 = vpack.c.bf16 %v633, %v633
        %v666 = vpack.c.bf16 %v634, %v634
        %v667 = vpack.c.bf16 %v635, %v635
        %v668 = vpack.c.bf16 %v636, %v636
        %v669 = vpack.c.bf16 %v637, %v637
        %v670 = vpack.c.bf16 %v638, %v638
        %v671 = vpack.c.bf16 %v639, %v639
        %v672 = vpack.c.bf16 %v640, %v640
        %v673 = vpack.c.bf16 %v641, %v641
        %675 = vset.pattern.permute.xlu0 0
        %676 = vperm.xlu0 %675, %v642
        %v677 = vpop.permute.xlu0 %676
        %v680 = vunpack.c.l.s4 839922192
        %v681 = vunpack.c.0.s8 %v680
        %v682 = vperm.slane %v677, %v681
        %684 = vset.pattern.permute.xlu0 0
        %685 = vperm.xlu0 %684, %v643
        %v686 = vpop.permute.xlu0 %685
        %v689 = vunpack.c.l.s4 839922192
        %v690 = vunpack.c.0.s8 %v689
        %v691 = vperm.slane %v686, %v690
        %693 = vset.pattern.permute.xlu0 0
        %694 = vperm.xlu0 %693, %v644
        %v695 = vpop.permute.xlu0 %694
        %v698 = vunpack.c.l.s4 839922192
        %v699 = vunpack.c.0.s8 %v698
        %v700 = vperm.slane %v695, %v699
        %702 = vset.pattern.permute.xlu0 0
        %703 = vperm.xlu0 %702, %v645
        %v704 = vpop.permute.xlu0 %703
        %v707 = vunpack.c.l.s4 839922192
        %v708 = vunpack.c.0.s8 %v707
        %v709 = vperm.slane %v704, %v708
        %711 = vset.pattern.permute.xlu0 0
        %712 = vperm.xlu0 %711, %v646
        %v713 = vpop.permute.xlu0 %712
        %v716 = vunpack.c.l.s4 839922192
        %v717 = vunpack.c.0.s8 %v716
        %v718 = vperm.slane %v713, %v717
        %720 = vset.pattern.permute.xlu0 0
        %721 = vperm.xlu0 %720, %v647
        %v722 = vpop.permute.xlu0 %721
        %v725 = vunpack.c.l.s4 839922192
        %v726 = vunpack.c.0.s8 %v725
        %v727 = vperm.slane %v722, %v726
        %729 = vset.pattern.permute.xlu0 0
        %730 = vperm.xlu0 %729, %v648
        %v731 = vpop.permute.xlu0 %730
        %v734 = vunpack.c.l.s4 839922192
        %v735 = vunpack.c.0.s8 %v734
        %v736 = vperm.slane %v731, %v735
        %738 = vset.pattern.permute.xlu0 0
        %739 = vperm.xlu0 %738, %v649
        %v740 = vpop.permute.xlu0 %739
        %v743 = vunpack.c.l.s4 839922192
        %v744 = vunpack.c.0.s8 %v743
        %v745 = vperm.slane %v740, %v744
        %747 = vset.pattern.permute.xlu0 0
        %748 = vperm.xlu0 %747, %v650
        %v749 = vpop.permute.xlu0 %748
        %v752 = vunpack.c.l.s4 839922192
        %v753 = vunpack.c.0.s8 %v752
        %v754 = vperm.slane %v749, %v753
        %756 = vset.pattern.permute.xlu0 0
        %757 = vperm.xlu0 %756, %v651
        %v758 = vpop.permute.xlu0 %757
        %v761 = vunpack.c.l.s4 839922192
        %v762 = vunpack.c.0.s8 %v761
        %v763 = vperm.slane %v758, %v762
        %765 = vset.pattern.permute.xlu0 0
        %766 = vperm.xlu0 %765, %v652
        %v767 = vpop.permute.xlu0 %766
        %v770 = vunpack.c.l.s4 839922192
        %v771 = vunpack.c.0.s8 %v770
        %v772 = vperm.slane %v767, %v771
        %774 = vset.pattern.permute.xlu0 0
        %775 = vperm.xlu0 %774, %v653
        %v776 = vpop.permute.xlu0 %775
        %v779 = vunpack.c.l.s4 839922192
        %v780 = vunpack.c.0.s8 %v779
        %v781 = vperm.slane %v776, %v780
        %783 = vset.pattern.permute.xlu0 0
        %784 = vperm.xlu0 %783, %v654
        %v785 = vpop.permute.xlu0 %784
        %v788 = vunpack.c.l.s4 839922192
        %v789 = vunpack.c.0.s8 %v788
        %v790 = vperm.slane %v785, %v789
        %792 = vset.pattern.permute.xlu0 0
        %793 = vperm.xlu0 %792, %v655
        %v794 = vpop.permute.xlu0 %793
        %v797 = vunpack.c.l.s4 839922192
        %v798 = vunpack.c.0.s8 %v797
        %v799 = vperm.slane %v794, %v798
        %801 = vset.pattern.permute.xlu0 0
        %802 = vperm.xlu0 %801, %v656
        %v803 = vpop.permute.xlu0 %802
        %v806 = vunpack.c.l.s4 839922192
        %v807 = vunpack.c.0.s8 %v806
        %v808 = vperm.slane %v803, %v807
        %810 = vset.pattern.permute.xlu0 0
        %811 = vperm.xlu0 %810, %v657
        %v812 = vpop.permute.xlu0 %811
        %v815 = vunpack.c.l.s4 839922192
        %v816 = vunpack.c.0.s8 %v815
        %v817 = vperm.slane %v812, %v816
        %819 = vset.pattern.permute.xlu0 0
        %820 = vperm.xlu0 %819, %v658
        %v821 = vpop.permute.xlu0 %820
        %v824 = vunpack.c.l.s4 839922192
        %v825 = vunpack.c.0.s8 %v824
        %v826 = vperm.slane %v821, %v825
        %828 = vset.pattern.permute.xlu0 0
        %829 = vperm.xlu0 %828, %v659
        %v830 = vpop.permute.xlu0 %829
        %v833 = vunpack.c.l.s4 839922192
        %v834 = vunpack.c.0.s8 %v833
        %v835 = vperm.slane %v830, %v834
        %837 = vset.pattern.permute.xlu0 0
        %838 = vperm.xlu0 %837, %v660
        %v839 = vpop.permute.xlu0 %838
        %v842 = vunpack.c.l.s4 839922192
        %v843 = vunpack.c.0.s8 %v842
        %v844 = vperm.slane %v839, %v843
        %846 = vset.pattern.permute.xlu0 0
        %847 = vperm.xlu0 %846, %v661
        %v848 = vpop.permute.xlu0 %847
        %v851 = vunpack.c.l.s4 839922192
        %v852 = vunpack.c.0.s8 %v851
        %v853 = vperm.slane %v848, %v852
        %855 = vset.pattern.permute.xlu0 0
        %856 = vperm.xlu0 %855, %v662
        %v857 = vpop.permute.xlu0 %856
        %v860 = vunpack.c.l.s4 839922192
        %v861 = vunpack.c.0.s8 %v860
        %v862 = vperm.slane %v857, %v861
        %864 = vset.pattern.permute.xlu0 0
        %865 = vperm.xlu0 %864, %v663
        %v866 = vpop.permute.xlu0 %865
        %v869 = vunpack.c.l.s4 839922192
        %v870 = vunpack.c.0.s8 %v869
        %v871 = vperm.slane %v866, %v870
        %873 = vset.pattern.permute.xlu0 0
        %874 = vperm.xlu0 %873, %v664
        %v875 = vpop.permute.xlu0 %874
        %v878 = vunpack.c.l.s4 839922192
        %v879 = vunpack.c.0.s8 %v878
        %v880 = vperm.slane %v875, %v879
        %882 = vset.pattern.permute.xlu0 0
        %883 = vperm.xlu0 %882, %v665
        %v884 = vpop.permute.xlu0 %883
        %v887 = vunpack.c.l.s4 839922192
        %v888 = vunpack.c.0.s8 %v887
        %v889 = vperm.slane %v884, %v888
        %891 = vset.pattern.permute.xlu0 0
        %892 = vperm.xlu0 %891, %v666
        %v893 = vpop.permute.xlu0 %892
        %v896 = vunpack.c.l.s4 839922192
        %v897 = vunpack.c.0.s8 %v896
        %v898 = vperm.slane %v893, %v897
        %900 = vset.pattern.permute.xlu0 0
        %901 = vperm.xlu0 %900, %v667
        %v902 = vpop.permute.xlu0 %901
        %v905 = vunpack.c.l.s4 839922192
        %v906 = vunpack.c.0.s8 %v905
        %v907 = vperm.slane %v902, %v906
        %909 = vset.pattern.permute.xlu0 0
        %910 = vperm.xlu0 %909, %v668
        %v911 = vpop.permute.xlu0 %910
        %v914 = vunpack.c.l.s4 839922192
        %v915 = vunpack.c.0.s8 %v914
        %v916 = vperm.slane %v911, %v915
        %918 = vset.pattern.permute.xlu0 0
        %919 = vperm.xlu0 %918, %v669
        %v920 = vpop.permute.xlu0 %919
        %v923 = vunpack.c.l.s4 839922192
        %v924 = vunpack.c.0.s8 %v923
        %v925 = vperm.slane %v920, %v924
        %927 = vset.pattern.permute.xlu0 0
        %928 = vperm.xlu0 %927, %v670
        %v929 = vpop.permute.xlu0 %928
        %v932 = vunpack.c.l.s4 839922192
        %v933 = vunpack.c.0.s8 %v932
        %v934 = vperm.slane %v929, %v933
        %936 = vset.pattern.permute.xlu0 0
        %937 = vperm.xlu0 %936, %v671
        %v938 = vpop.permute.xlu0 %937
        %v941 = vunpack.c.l.s4 839922192
        %v942 = vunpack.c.0.s8 %v941
        %v943 = vperm.slane %v938, %v942
        %945 = vset.pattern.permute.xlu0 0
        %946 = vperm.xlu0 %945, %v672
        %v947 = vpop.permute.xlu0 %946
        %v950 = vunpack.c.l.s4 839922192
        %v951 = vunpack.c.0.s8 %v950
        %v952 = vperm.slane %v947, %v951
        %954 = vset.pattern.permute.xlu0 0
        %955 = vperm.xlu0 %954, %v673
        %v956 = vpop.permute.xlu0 %955
        %v959 = vunpack.c.l.s4 839922192
        %v960 = vunpack.c.0.s8 %v959
        %v961 = vperm.slane %v956, %v960
        %v962 = vunpack.c.l.bf16 %v578
        %v963 = vunpack.c.l.bf16 %v579
        %v964 = vunpack.c.l.bf16 %v580
        %v965 = vunpack.c.l.bf16 %v581
        %v966 = vunpack.c.l.bf16 %v582
        %v967 = vunpack.c.l.bf16 %v583
        %v968 = vunpack.c.l.bf16 %v584
        %v969 = vunpack.c.l.bf16 %v585
        %v970 = vunpack.c.l.bf16 %v586
        %v971 = vunpack.c.l.bf16 %v587
        %v972 = vunpack.c.l.bf16 %v588
        %v973 = vunpack.c.l.bf16 %v589
        %v974 = vunpack.c.l.bf16 %v590
        %v975 = vunpack.c.l.bf16 %v591
        %v976 = vunpack.c.l.bf16 %v592
        %v977 = vunpack.c.l.bf16 %v593
        %v978 = vunpack.c.l.bf16 %v594
        %v979 = vunpack.c.l.bf16 %v595
        %v980 = vunpack.c.l.bf16 %v596
        %v981 = vunpack.c.l.bf16 %v597
        %v982 = vunpack.c.l.bf16 %v598
        %v983 = vunpack.c.l.bf16 %v599
        %v984 = vunpack.c.l.bf16 %v600
        %v985 = vunpack.c.l.bf16 %v601
        %v986 = vunpack.c.l.bf16 %v602
        %v987 = vunpack.c.l.bf16 %v603
        %v988 = vunpack.c.l.bf16 %v604
        %v989 = vunpack.c.l.bf16 %v605
        %v990 = vunpack.c.l.bf16 %v606
        %v991 = vunpack.c.l.bf16 %v607
        %v992 = vunpack.c.l.bf16 %v608
        %v993 = vunpack.c.l.bf16 %v609
        %v994 = vunpack.c.l.bf16 %v682
        %v995 = vunpack.c.l.bf16 %v691
        %v996 = vunpack.c.l.bf16 %v700
        %v997 = vunpack.c.l.bf16 %v709
        %v998 = vunpack.c.l.bf16 %v718
        %v999 = vunpack.c.l.bf16 %v727
        %v1000 = vunpack.c.l.bf16 %v736
        %v1001 = vunpack.c.l.bf16 %v745
        %v1002 = vunpack.c.l.bf16 %v754
        %v1003 = vunpack.c.l.bf16 %v763
        %v1004 = vunpack.c.l.bf16 %v772
        %v1005 = vunpack.c.l.bf16 %v781
        %v1006 = vunpack.c.l.bf16 %v790
        %v1007 = vunpack.c.l.bf16 %v799
        %v1008 = vunpack.c.l.bf16 %v808
        %v1009 = vunpack.c.l.bf16 %v817
        %v1010 = vunpack.c.l.bf16 %v826
        %v1011 = vunpack.c.l.bf16 %v835
        %v1012 = vunpack.c.l.bf16 %v844
        %v1013 = vunpack.c.l.bf16 %v853
        %v1014 = vunpack.c.l.bf16 %v862
        %v1015 = vunpack.c.l.bf16 %v871
        %v1016 = vunpack.c.l.bf16 %v880
        %v1017 = vunpack.c.l.bf16 %v889
        %v1018 = vunpack.c.l.bf16 %v898
        %v1019 = vunpack.c.l.bf16 %v907
        %v1020 = vunpack.c.l.bf16 %v916
        %v1021 = vunpack.c.l.bf16 %v925
        %v1022 = vunpack.c.l.bf16 %v934
        %v1023 = vunpack.c.l.bf16 %v943
        %v1024 = vunpack.c.l.bf16 %v952
        %v1025 = vunpack.c.l.bf16 %v961
        %v1026 = vadd.f32 %v962, %v994
        %v1027 = vadd.f32 %v963, %v995
        %v1028 = vadd.f32 %v964, %v996
        %v1029 = vadd.f32 %v965, %v997
        %v1030 = vadd.f32 %v966, %v998
        %v1031 = vadd.f32 %v967, %v999
        %v1032 = vadd.f32 %v968, %v1000
        %v1033 = vadd.f32 %v969, %v1001
        %v1034 = vadd.f32 %v970, %v1002
        %v1035 = vadd.f32 %v971, %v1003
        %v1036 = vadd.f32 %v972, %v1004
        %v1037 = vadd.f32 %v973, %v1005
        %v1038 = vadd.f32 %v974, %v1006
        %v1039 = vadd.f32 %v975, %v1007
        %v1040 = vadd.f32 %v976, %v1008
        %v1041 = vadd.f32 %v977, %v1009
        %v1042 = vadd.f32 %v978, %v1010
        %v1043 = vadd.f32 %v979, %v1011
        %v1044 = vadd.f32 %v980, %v1012
        %v1045 = vadd.f32 %v981, %v1013
        %v1046 = vadd.f32 %v982, %v1014
        %v1047 = vadd.f32 %v983, %v1015
        %v1048 = vadd.f32 %v984, %v1016
        %v1049 = vadd.f32 %v985, %v1017
        %v1050 = vadd.f32 %v986, %v1018
        %v1051 = vadd.f32 %v987, %v1019
        %v1052 = vadd.f32 %v988, %v1020
        %v1053 = vadd.f32 %v989, %v1021
        %v1054 = vadd.f32 %v990, %v1022
        %v1055 = vadd.f32 %v991, %v1023
        %v1056 = vadd.f32 %v992, %v1024
        %v1057 = vadd.f32 %v993, %v1025
        %v1058 = vpack.c.bf16 %v1026, %v1026
        %v1059 = vpack.c.bf16 %v1027, %v1027
        %v1060 = vpack.c.bf16 %v1028, %v1028
        %v1061 = vpack.c.bf16 %v1029, %v1029
        %v1062 = vpack.c.bf16 %v1030, %v1030
        %v1063 = vpack.c.bf16 %v1031, %v1031
        %v1064 = vpack.c.bf16 %v1032, %v1032
        %v1065 = vpack.c.bf16 %v1033, %v1033
        %v1066 = vpack.c.bf16 %v1034, %v1034
        %v1067 = vpack.c.bf16 %v1035, %v1035
        %v1068 = vpack.c.bf16 %v1036, %v1036
        %v1069 = vpack.c.bf16 %v1037, %v1037
        %v1070 = vpack.c.bf16 %v1038, %v1038
        %v1071 = vpack.c.bf16 %v1039, %v1039
        %v1072 = vpack.c.bf16 %v1040, %v1040
        %v1073 = vpack.c.bf16 %v1041, %v1041
        %v1074 = vpack.c.bf16 %v1042, %v1042
        %v1075 = vpack.c.bf16 %v1043, %v1043
        %v1076 = vpack.c.bf16 %v1044, %v1044
        %v1077 = vpack.c.bf16 %v1045, %v1045
        %v1078 = vpack.c.bf16 %v1046, %v1046
        %v1079 = vpack.c.bf16 %v1047, %v1047
        %v1080 = vpack.c.bf16 %v1048, %v1048
        %v1081 = vpack.c.bf16 %v1049, %v1049
        %v1082 = vpack.c.bf16 %v1050, %v1050
        %v1083 = vpack.c.bf16 %v1051, %v1051
        %v1084 = vpack.c.bf16 %v1052, %v1052
        %v1085 = vpack.c.bf16 %v1053, %v1053
        %v1086 = vpack.c.bf16 %v1054, %v1054
        %v1087 = vpack.c.bf16 %v1055, %v1055
        %v1088 = vpack.c.bf16 %v1056, %v1056
        %v1089 = vpack.c.bf16 %v1057, %v1057
        %v1090 = vunpack.c.l.bf16 %v1058
        %v1091 = vunpack.c.l.bf16 %v1059
        %v1092 = vunpack.c.l.bf16 %v1060
        %v1093 = vunpack.c.l.bf16 %v1061
        %v1094 = vunpack.c.l.bf16 %v1062
        %v1095 = vunpack.c.l.bf16 %v1063
        %v1096 = vunpack.c.l.bf16 %v1064
        %v1097 = vunpack.c.l.bf16 %v1065
        %v1098 = vunpack.c.l.bf16 %v1066
        %v1099 = vunpack.c.l.bf16 %v1067
        %v1100 = vunpack.c.l.bf16 %v1068
        %v1101 = vunpack.c.l.bf16 %v1069
        %v1102 = vunpack.c.l.bf16 %v1070
        %v1103 = vunpack.c.l.bf16 %v1071
        %v1104 = vunpack.c.l.bf16 %v1072
        %v1105 = vunpack.c.l.bf16 %v1073
        %v1106 = vunpack.c.l.bf16 %v1074
        %v1107 = vunpack.c.l.bf16 %v1075
        %v1108 = vunpack.c.l.bf16 %v1076
        %v1109 = vunpack.c.l.bf16 %v1077
        %v1110 = vunpack.c.l.bf16 %v1078
        %v1111 = vunpack.c.l.bf16 %v1079
        %v1112 = vunpack.c.l.bf16 %v1080
        %v1113 = vunpack.c.l.bf16 %v1081
        %v1114 = vunpack.c.l.bf16 %v1082
        %v1115 = vunpack.c.l.bf16 %v1083
        %v1116 = vunpack.c.l.bf16 %v1084
        %v1117 = vunpack.c.l.bf16 %v1085
        %v1118 = vunpack.c.l.bf16 %v1086
        %v1119 = vunpack.c.l.bf16 %v1087
        %v1120 = vunpack.c.l.bf16 %v1088
        %v1121 = vunpack.c.l.bf16 %v1089
        %v1122 = vmul.f32 %v1090, 0.20019531
        %v1123 = vmul.f32 %v1091, 0.20019531
        %v1124 = vmul.f32 %v1092, 0.20019531
        %v1125 = vmul.f32 %v1093, 0.20019531
        %v1126 = vmul.f32 %v1094, 0.20019531
        %v1127 = vmul.f32 %v1095, 0.20019531
        %v1128 = vmul.f32 %v1096, 0.20019531
        %v1129 = vmul.f32 %v1097, 0.20019531
        %v1130 = vmul.f32 %v1098, 0.20019531
        %v1131 = vmul.f32 %v1099, 0.20019531
        %v1132 = vmul.f32 %v1100, 0.20019531
        %v1133 = vmul.f32 %v1101, 0.20019531
        %v1134 = vmul.f32 %v1102, 0.20019531
        %v1135 = vmul.f32 %v1103, 0.20019531
        %v1136 = vmul.f32 %v1104, 0.20019531
        %v1137 = vmul.f32 %v1105, 0.20019531
        %v1138 = vmul.f32 %v1106, 0.20019531
        %v1139 = vmul.f32 %v1107, 0.20019531
        %v1140 = vmul.f32 %v1108, 0.20019531
        %v1141 = vmul.f32 %v1109, 0.20019531
        %v1142 = vmul.f32 %v1110, 0.20019531
        %v1143 = vmul.f32 %v1111, 0.20019531
        %v1144 = vmul.f32 %v1112, 0.20019531
        %v1145 = vmul.f32 %v1113, 0.20019531
        %v1146 = vmul.f32 %v1114, 0.20019531
        %v1147 = vmul.f32 %v1115, 0.20019531
        %v1148 = vmul.f32 %v1116, 0.20019531
        %v1149 = vmul.f32 %v1117, 0.20019531
        %v1150 = vmul.f32 %v1118, 0.20019531
        %v1151 = vmul.f32 %v1119, 0.20019531
        %v1152 = vmul.f32 %v1120, 0.20019531
        %v1153 = vmul.f32 %v1121, 0.20019531
        %v1154 = vpack.c.bf16 %v1122, %v1122
        %v1155 = vpack.c.bf16 %v1123, %v1123
        %v1156 = vpack.c.bf16 %v1124, %v1124
        %v1157 = vpack.c.bf16 %v1125, %v1125
        %v1158 = vpack.c.bf16 %v1126, %v1126
        %v1159 = vpack.c.bf16 %v1127, %v1127
        %v1160 = vpack.c.bf16 %v1128, %v1128
        %v1161 = vpack.c.bf16 %v1129, %v1129
        %v1162 = vpack.c.bf16 %v1130, %v1130
        %v1163 = vpack.c.bf16 %v1131, %v1131
        %v1164 = vpack.c.bf16 %v1132, %v1132
        %v1165 = vpack.c.bf16 %v1133, %v1133
        %v1166 = vpack.c.bf16 %v1134, %v1134
        %v1167 = vpack.c.bf16 %v1135, %v1135
        %v1168 = vpack.c.bf16 %v1136, %v1136
        %v1169 = vpack.c.bf16 %v1137, %v1137
        %v1170 = vpack.c.bf16 %v1138, %v1138
        %v1171 = vpack.c.bf16 %v1139, %v1139
        %v1172 = vpack.c.bf16 %v1140, %v1140
        %v1173 = vpack.c.bf16 %v1141, %v1141
        %v1174 = vpack.c.bf16 %v1142, %v1142
        %v1175 = vpack.c.bf16 %v1143, %v1143
        %v1176 = vpack.c.bf16 %v1144, %v1144
        %v1177 = vpack.c.bf16 %v1145, %v1145
        %v1178 = vpack.c.bf16 %v1146, %v1146
        %v1179 = vpack.c.bf16 %v1147, %v1147
        %v1180 = vpack.c.bf16 %v1148, %v1148
        %v1181 = vpack.c.bf16 %v1149, %v1149
        %v1182 = vpack.c.bf16 %v1150, %v1150
        %v1183 = vpack.c.bf16 %v1151, %v1151
        %v1184 = vpack.c.bf16 %v1152, %v1152
        %v1185 = vpack.c.bf16 %v1153, %v1153
        %v1186 = vunpack.c.l.bf16 %v1154
        %v1187 = vunpack.c.l.bf16 %v1155
        %v1188 = vunpack.c.l.bf16 %v1156
        %v1189 = vunpack.c.l.bf16 %v1157
        %v1190 = vunpack.c.l.bf16 %v1158
        %v1191 = vunpack.c.l.bf16 %v1159
        %v1192 = vunpack.c.l.bf16 %v1160
        %v1193 = vunpack.c.l.bf16 %v1161
        %v1194 = vunpack.c.l.bf16 %v1162
        %v1195 = vunpack.c.l.bf16 %v1163
        %v1196 = vunpack.c.l.bf16 %v1164
        %v1197 = vunpack.c.l.bf16 %v1165
        %v1198 = vunpack.c.l.bf16 %v1166
        %v1199 = vunpack.c.l.bf16 %v1167
        %v1200 = vunpack.c.l.bf16 %v1168
        %v1201 = vunpack.c.l.bf16 %v1169
        %v1202 = vunpack.c.l.bf16 %v1170
        %v1203 = vunpack.c.l.bf16 %v1171
        %v1204 = vunpack.c.l.bf16 %v1172
        %v1205 = vunpack.c.l.bf16 %v1173
        %v1206 = vunpack.c.l.bf16 %v1174
        %v1207 = vunpack.c.l.bf16 %v1175
        %v1208 = vunpack.c.l.bf16 %v1176
        %v1209 = vunpack.c.l.bf16 %v1177
        %v1210 = vunpack.c.l.bf16 %v1178
        %v1211 = vunpack.c.l.bf16 %v1179
        %v1212 = vunpack.c.l.bf16 %v1180
        %v1213 = vunpack.c.l.bf16 %v1181
        %v1214 = vunpack.c.l.bf16 %v1182
        %v1215 = vunpack.c.l.bf16 %v1183
        %v1216 = vunpack.c.l.bf16 %v1184
        %v1217 = vunpack.c.l.bf16 %v1185
        %v1218 = vmax.f32 %v1090, %v1186
        %v1219 = vmax.f32 %v1091, %v1187
        %v1220 = vmax.f32 %v1092, %v1188
        %v1221 = vmax.f32 %v1093, %v1189
        %v1222 = vmax.f32 %v1094, %v1190
        %v1223 = vmax.f32 %v1095, %v1191
        %v1224 = vmax.f32 %v1096, %v1192
        %v1225 = vmax.f32 %v1097, %v1193
        %v1226 = vmax.f32 %v1098, %v1194
        %v1227 = vmax.f32 %v1099, %v1195
        %v1228 = vmax.f32 %v1100, %v1196
        %v1229 = vmax.f32 %v1101, %v1197
        %v1230 = vmax.f32 %v1102, %v1198
        %v1231 = vmax.f32 %v1103, %v1199
        %v1232 = vmax.f32 %v1104, %v1200
        %v1233 = vmax.f32 %v1105, %v1201
        %v1234 = vmax.f32 %v1106, %v1202
        %v1235 = vmax.f32 %v1107, %v1203
        %v1236 = vmax.f32 %v1108, %v1204
        %v1237 = vmax.f32 %v1109, %v1205
        %v1238 = vmax.f32 %v1110, %v1206
        %v1239 = vmax.f32 %v1111, %v1207
        %v1240 = vmax.f32 %v1112, %v1208
        %v1241 = vmax.f32 %v1113, %v1209
        %v1242 = vmax.f32 %v1114, %v1210
        %v1243 = vmax.f32 %v1115, %v1211
        %v1244 = vmax.f32 %v1116, %v1212
        %v1245 = vmax.f32 %v1117, %v1213
        %v1246 = vmax.f32 %v1118, %v1214
        %v1247 = vmax.f32 %v1119, %v1215
        %v1248 = vmax.f32 %v1120, %v1216
        %v1249 = vmax.f32 %v1121, %v1217
        %v1250 = vpack.c.bf16 %v1219, %v1218
        %v1251 = vpack.c.bf16 %v1221, %v1220
        %v1252 = vpack.c.bf16 %v1223, %v1222
        %v1253 = vpack.c.bf16 %v1225, %v1224
        %v1254 = vpack.c.bf16 %v1227, %v1226
        %v1255 = vpack.c.bf16 %v1229, %v1228
        %v1256 = vpack.c.bf16 %v1231, %v1230
        %v1257 = vpack.c.bf16 %v1233, %v1232
        %v1258 = vpack.c.bf16 %v1235, %v1234
        %v1259 = vpack.c.bf16 %v1237, %v1236
        %v1260 = vpack.c.bf16 %v1239, %v1238
        %v1261 = vpack.c.bf16 %v1241, %v1240
        %v1262 = vpack.c.bf16 %v1243, %v1242
        %v1263 = vpack.c.bf16 %v1245, %v1244
        %v1264 = vpack.c.bf16 %v1247, %v1246
        %v1265 = vpack.c.bf16 %v1249, %v1248
        %v1266 = vld [vmem:[%s3] sm:$0xff]
        %v1267 = vld [vmem:[%s3 + $0x8] sm:$0xff]
        %v1268 = vld [vmem:[%s3 + $0x10] sm:$0xff]
        %v1269 = vld [vmem:[%s3 + $0x18] sm:$0xff]
        %v1270 = vld [vmem:[%s3 + $0x20] sm:$0xff]
        %v1271 = vld [vmem:[%s3 + $0x28] sm:$0xff]
        %v1272 = vld [vmem:[%s3 + $0x30] sm:$0xff]
        %v1273 = vld [vmem:[%s3 + $0x38] sm:$0xff]
        %v1274 = vld [vmem:[%s3 + $0x40] sm:$0xff]
        %v1275 = vld [vmem:[%s3 + $0x48] sm:$0xff]
        %v1276 = vld [vmem:[%s3 + $0x50] sm:$0xff]
        %v1277 = vld [vmem:[%s3 + $0x58] sm:$0xff]
        %v1278 = vld [vmem:[%s3 + $0x60] sm:$0xff]
        %v1279 = vld [vmem:[%s3 + $0x68] sm:$0xff]
        %v1280 = vld [vmem:[%s3 + $0x70] sm:$0xff]
        %v1281 = vld [vmem:[%s3 + $0x78] sm:$0xff]
        %v1298 = vunpack.c.l.b16 %v1266
        %v1299 = vunpack.c.h.b16 %v1266
        %v1300 = vunpack.c.l.b16 %v1267
        %v1301 = vunpack.c.h.b16 %v1267
        %v1302 = vunpack.c.l.b16 %v1268
        %v1303 = vunpack.c.h.b16 %v1268
        %v1304 = vunpack.c.l.b16 %v1269
        %v1305 = vunpack.c.h.b16 %v1269
        %v1306 = vunpack.c.l.b16 %v1270
        %v1307 = vunpack.c.h.b16 %v1270
        %v1308 = vunpack.c.l.b16 %v1271
        %v1309 = vunpack.c.h.b16 %v1271
        %v1310 = vunpack.c.l.b16 %v1272
        %v1311 = vunpack.c.h.b16 %v1272
        %v1312 = vunpack.c.l.b16 %v1273
        %v1313 = vunpack.c.h.b16 %v1273
        %v1314 = vunpack.c.l.b16 %v1274
        %v1315 = vunpack.c.h.b16 %v1274
        %v1316 = vunpack.c.l.b16 %v1275
        %v1317 = vunpack.c.h.b16 %v1275
        %v1318 = vunpack.c.l.b16 %v1276
        %v1319 = vunpack.c.h.b16 %v1276
        %v1320 = vunpack.c.l.b16 %v1277
        %v1321 = vunpack.c.h.b16 %v1277
        %v1322 = vunpack.c.l.b16 %v1278
        %v1323 = vunpack.c.h.b16 %v1278
        %v1324 = vunpack.c.l.b16 %v1279
        %v1325 = vunpack.c.h.b16 %v1279
        %v1326 = vunpack.c.l.b16 %v1280
        %v1327 = vunpack.c.h.b16 %v1280
        %v1328 = vunpack.c.l.b16 %v1281
        %v1329 = vunpack.c.h.b16 %v1281
        %v1330 = vpack.c.b16 %v1300, %v1298
        %v1331 = vpack.c.b16 %v1301, %v1299
        %v1332 = vpack.c.b16 %v1304, %v1302
        %v1333 = vpack.c.b16 %v1305, %v1303
        %v1334 = vpack.c.b16 %v1308, %v1306
        %v1335 = vpack.c.b16 %v1309, %v1307
        %v1336 = vpack.c.b16 %v1312, %v1310
        %v1337 = vpack.c.b16 %v1313, %v1311
        %v1338 = vpack.c.b16 %v1316, %v1314
        %v1339 = vpack.c.b16 %v1317, %v1315
        %v1340 = vpack.c.b16 %v1320, %v1318
        %v1341 = vpack.c.b16 %v1321, %v1319
        %v1342 = vpack.c.b16 %v1324, %v1322
        %v1343 = vpack.c.b16 %v1325, %v1323
        %v1344 = vpack.c.b16 %v1328, %v1326
        %v1345 = vpack.c.b16 %v1329, %v1327
        %1362 = vmatpush.bf16.msra.mxu0 %v1257
        %1363 = vmatpush.bf16.msra.mxu0 %v1256
        %1364 = vmatpush.bf16.msra.mxu0 %v1255
        %1365 = vmatpush.bf16.msra.mxu0 %v1254
        %1366 = vmatpush.bf16.msra.mxu0 %v1253
        %1367 = vmatpush.bf16.msra.mxu0 %v1252
        %1368 = vmatpush.bf16.msra.mxu0 %v1251
        %1369 = vmatpush.bf16.msra.mxu0 %v1250
        %1370 = vmatmul.bf16.gmra.mxu0 %v1330
        %v1371 = vpop.f32.mrf.mxu0
        %v1372 = vadd.f32 0.0, %v1371
        %v1373 = vpop.f32.mrf.mxu0
        %v1374 = vadd.f32 0.0, %v1373
        %1375 = vmatmul.bf16.gmra.mxu0 %v1332
        %v1376 = vpop.f32.mrf.mxu0
        %v1377 = vadd.f32 0.0, %v1376
        %v1378 = vpop.f32.mrf.mxu0
        %v1379 = vadd.f32 0.0, %v1378
        %1380 = vmatmul.bf16.gmra.mxu0 %v1334
        %v1381 = vpop.f32.mrf.mxu0
        %v1382 = vadd.f32 0.0, %v1381
        %v1383 = vpop.f32.mrf.mxu0
        %v1384 = vadd.f32 0.0, %v1383
        %1385 = vmatmul.bf16.gmra.mxu0 %v1336
        %v1386 = vpop.f32.mrf.mxu0
        %v1387 = vadd.f32 0.0, %v1386
        %v1388 = vpop.f32.mrf.mxu0
        %v1389 = vadd.f32 0.0, %v1388
        %1390 = vmatmul.bf16.gmra.mxu0 %v1338
        %v1391 = vpop.f32.mrf.mxu0
        %v1392 = vadd.f32 0.0, %v1391
        %v1393 = vpop.f32.mrf.mxu0
        %v1394 = vadd.f32 0.0, %v1393
        %1395 = vmatmul.bf16.gmra.mxu0 %v1340
        %v1396 = vpop.f32.mrf.mxu0
        %v1397 = vadd.f32 0.0, %v1396
        %v1398 = vpop.f32.mrf.mxu0
        %v1399 = vadd.f32 0.0, %v1398
        %1400 = vmatmul.bf16.gmra.mxu0 %v1342
        %v1401 = vpop.f32.mrf.mxu0
        %v1402 = vadd.f32 0.0, %v1401
        %v1403 = vpop.f32.mrf.mxu0
        %v1404 = vadd.f32 0.0, %v1403
        %1405 = vmatmul.bf16.gmra.mxu0 %v1344
        %v1406 = vpop.f32.mrf.mxu0
        %v1407 = vadd.f32 0.0, %v1406
        %v1408 = vpop.f32.mrf.mxu0
        %v1409 = vadd.f32 0.0, %v1408
        %1410 = vdwg.mxu0
        %1411 = vmatpush.bf16.msra.mxu0 %v1265
        %1412 = vmatpush.bf16.msra.mxu0 %v1264
        %1413 = vmatpush.bf16.msra.mxu0 %v1263
        %1414 = vmatpush.bf16.msra.mxu0 %v1262
        %1415 = vmatpush.bf16.msra.mxu0 %v1261
        %1416 = vmatpush.bf16.msra.mxu0 %v1260
        %1417 = vmatpush.bf16.msra.mxu0 %v1259
        %1418 = vmatpush.bf16.msra.mxu0 %v1258
        %1419 = vmatmul.bf16.gmra.mxu0 %v1331
        %v1420 = vpop.f32.mrf.mxu0
        %v1421 = vadd.f32 %v1372, %v1420
        %v1422 = vpop.f32.mrf.mxu0
        %v1423 = vadd.f32 %v1374, %v1422
        %1424 = vmatmul.bf16.gmra.mxu0 %v1333
        %v1425 = vpop.f32.mrf.mxu0
        %v1426 = vadd.f32 %v1377, %v1425
        %v1427 = vpop.f32.mrf.mxu0
        %v1428 = vadd.f32 %v1379, %v1427
        %1429 = vmatmul.bf16.gmra.mxu0 %v1335
        %v1430 = vpop.f32.mrf.mxu0
        %v1431 = vadd.f32 %v1382, %v1430
        %v1432 = vpop.f32.mrf.mxu0
        %v1433 = vadd.f32 %v1384, %v1432
        %1434 = vmatmul.bf16.gmra.mxu0 %v1337
        %v1435 = vpop.f32.mrf.mxu0
        %v1436 = vadd.f32 %v1387, %v1435
        %v1437 = vpop.f32.mrf.mxu0
        %v1438 = vadd.f32 %v1389, %v1437
        %1439 = vmatmul.bf16.gmra.mxu0 %v1339
        %v1440 = vpop.f32.mrf.mxu0
        %v1441 = vadd.f32 %v1392, %v1440
        %v1442 = vpop.f32.mrf.mxu0
        %v1443 = vadd.f32 %v1394, %v1442
        %1444 = vmatmul.bf16.gmra.mxu0 %v1341
        %v1445 = vpop.f32.mrf.mxu0
        %v1446 = vadd.f32 %v1397, %v1445
        %v1447 = vpop.f32.mrf.mxu0
        %v1448 = vadd.f32 %v1399, %v1447
        %1449 = vmatmul.bf16.gmra.mxu0 %v1343
        %v1450 = vpop.f32.mrf.mxu0
        %v1451 = vadd.f32 %v1402, %v1450
        %v1452 = vpop.f32.mrf.mxu0
        %v1453 = vadd.f32 %v1404, %v1452
        %1454 = vmatmul.bf16.gmra.mxu0 %v1345
        %v1455 = vpop.f32.mrf.mxu0
        %v1456 = vadd.f32 %v1407, %v1455
        %v1457 = vpop.f32.mrf.mxu0
        %v1458 = vadd.f32 %v1409, %v1457
        %1459 = vdwg.mxu0
        %v1460 = vpack.c.bf16 %v1421, %v1421
        %v1461 = vpack.c.bf16 %v1423, %v1423
        %v1462 = vpack.c.bf16 %v1426, %v1426
        %v1463 = vpack.c.bf16 %v1428, %v1428
        %v1464 = vpack.c.bf16 %v1431, %v1431
        %v1465 = vpack.c.bf16 %v1433, %v1433
        %v1466 = vpack.c.bf16 %v1436, %v1436
        %v1467 = vpack.c.bf16 %v1438, %v1438
        %v1468 = vpack.c.bf16 %v1441, %v1441
        %v1469 = vpack.c.bf16 %v1443, %v1443
        %v1470 = vpack.c.bf16 %v1446, %v1446
        %v1471 = vpack.c.bf16 %v1448, %v1448
        %v1472 = vpack.c.bf16 %v1451, %v1451
        %v1473 = vpack.c.bf16 %v1453, %v1453
        %v1474 = vpack.c.bf16 %v1456, %v1456
        %v1475 = vpack.c.bf16 %v1458, %v1458
        %v1476 = vld [vmem:[%s4] sm:$0xff]
        %v1477 = vld [vmem:[%s4 + $0x8] sm:$0xff]
        %v1478 = vld [vmem:[%s4 + $0x10] sm:$0xff]
        %v1479 = vld [vmem:[%s4 + $0x18] sm:$0xff]
        %v1480 = vld [vmem:[%s4 + $0x20] sm:$0xff]
        %v1481 = vld [vmem:[%s4 + $0x28] sm:$0xff]
        %v1482 = vld [vmem:[%s4 + $0x30] sm:$0xff]
        %v1483 = vld [vmem:[%s4 + $0x38] sm:$0xff]
        %v1484 = vld [vmem:[%s4 + $0x40] sm:$0xff]
        %v1485 = vld [vmem:[%s4 + $0x48] sm:$0xff]
        %v1486 = vld [vmem:[%s4 + $0x50] sm:$0xff]
        %v1487 = vld [vmem:[%s4 + $0x58] sm:$0xff]
        %v1488 = vld [vmem:[%s4 + $0x60] sm:$0xff]
        %v1489 = vld [vmem:[%s4 + $0x68] sm:$0xff]
        %v1490 = vld [vmem:[%s4 + $0x70] sm:$0xff]
        %v1491 = vld [vmem:[%s4 + $0x78] sm:$0xff]
        %v1492 = vpack.c.bf16 %v1476, %v1476
        %v1493 = vpack.c.bf16 %v1477, %v1477
        %v1494 = vpack.c.bf16 %v1478, %v1478
        %v1495 = vpack.c.bf16 %v1479, %v1479
        %v1496 = vpack.c.bf16 %v1480, %v1480
        %v1497 = vpack.c.bf16 %v1481, %v1481
        %v1498 = vpack.c.bf16 %v1482, %v1482
        %v1499 = vpack.c.bf16 %v1483, %v1483
        %v1500 = vpack.c.bf16 %v1484, %v1484
        %v1501 = vpack.c.bf16 %v1485, %v1485
        %v1502 = vpack.c.bf16 %v1486, %v1486
        %v1503 = vpack.c.bf16 %v1487, %v1487
        %v1504 = vpack.c.bf16 %v1488, %v1488
        %v1505 = vpack.c.bf16 %v1489, %v1489
        %v1506 = vpack.c.bf16 %v1490, %v1490
        %v1507 = vpack.c.bf16 %v1491, %v1491
        %1509 = vset.pattern.permute.xlu0 0
        %1510 = vperm.xlu0 %1509, %v1492
        %v1511 = vpop.permute.xlu0 %1510
        %v1514 = vunpack.c.l.s4 839922192
        %v1515 = vunpack.c.0.s8 %v1514
        %v1516 = vperm.slane %v1511, %v1515
        %1518 = vset.pattern.permute.xlu0 0
        %1519 = vperm.xlu0 %1518, %v1493
        %v1520 = vpop.permute.xlu0 %1519
        %v1523 = vunpack.c.l.s4 839922192
        %v1524 = vunpack.c.0.s8 %v1523
        %v1525 = vperm.slane %v1520, %v1524
        %1527 = vset.pattern.permute.xlu0 0
        %1528 = vperm.xlu0 %1527, %v1494
        %v1529 = vpop.permute.xlu0 %1528
        %v1532 = vunpack.c.l.s4 839922192
        %v1533 = vunpack.c.0.s8 %v1532
        %v1534 = vperm.slane %v1529, %v1533
        %1536 = vset.pattern.permute.xlu0 0
        %1537 = vperm.xlu0 %1536, %v1495
        %v1538 = vpop.permute.xlu0 %1537
        %v1541 = vunpack.c.l.s4 839922192
        %v1542 = vunpack.c.0.s8 %v1541
        %v1543 = vperm.slane %v1538, %v1542
        %1545 = vset.pattern.permute.xlu0 0
        %1546 = vperm.xlu0 %1545, %v1496
        %v1547 = vpop.permute.xlu0 %1546
        %v1550 = vunpack.c.l.s4 839922192
        %v1551 = vunpack.c.0.s8 %v1550
        %v1552 = vperm.slane %v1547, %v1551
        %1554 = vset.pattern.permute.xlu0 0
        %1555 = vperm.xlu0 %1554, %v1497
        %v1556 = vpop.permute.xlu0 %1555
        %v1559 = vunpack.c.l.s4 839922192
        %v1560 = vunpack.c.0.s8 %v1559
        %v1561 = vperm.slane %v1556, %v1560
        %1563 = vset.pattern.permute.xlu0 0
        %1564 = vperm.xlu0 %1563, %v1498
        %v1565 = vpop.permute.xlu0 %1564
        %v1568 = vunpack.c.l.s4 839922192
        %v1569 = vunpack.c.0.s8 %v1568
        %v1570 = vperm.slane %v1565, %v1569
        %1572 = vset.pattern.permute.xlu0 0
        %1573 = vperm.xlu0 %1572, %v1499
        %v1574 = vpop.permute.xlu0 %1573
        %v1577 = vunpack.c.l.s4 839922192
        %v1578 = vunpack.c.0.s8 %v1577
        %v1579 = vperm.slane %v1574, %v1578
        %1581 = vset.pattern.permute.xlu0 0
        %1582 = vperm.xlu0 %1581, %v1500
        %v1583 = vpop.permute.xlu0 %1582
        %v1586 = vunpack.c.l.s4 839922192
        %v1587 = vunpack.c.0.s8 %v1586
        %v1588 = vperm.slane %v1583, %v1587
        %1590 = vset.pattern.permute.xlu0 0
        %1591 = vperm.xlu0 %1590, %v1501
        %v1592 = vpop.permute.xlu0 %1591
        %v1595 = vunpack.c.l.s4 839922192
        %v1596 = vunpack.c.0.s8 %v1595
        %v1597 = vperm.slane %v1592, %v1596
        %1599 = vset.pattern.permute.xlu0 0
        %1600 = vperm.xlu0 %1599, %v1502
        %v1601 = vpop.permute.xlu0 %1600
        %v1604 = vunpack.c.l.s4 839922192
        %v1605 = vunpack.c.0.s8 %v1604
        %v1606 = vperm.slane %v1601, %v1605
        %1608 = vset.pattern.permute.xlu0 0
        %1609 = vperm.xlu0 %1608, %v1503
        %v1610 = vpop.permute.xlu0 %1609
        %v1613 = vunpack.c.l.s4 839922192
        %v1614 = vunpack.c.0.s8 %v1613
        %v1615 = vperm.slane %v1610, %v1614
        %1617 = vset.pattern.permute.xlu0 0
        %1618 = vperm.xlu0 %1617, %v1504
        %v1619 = vpop.permute.xlu0 %1618
        %v1622 = vunpack.c.l.s4 839922192
        %v1623 = vunpack.c.0.s8 %v1622
        %v1624 = vperm.slane %v1619, %v1623
        %1626 = vset.pattern.permute.xlu0 0
        %1627 = vperm.xlu0 %1626, %v1505
        %v1628 = vpop.permute.xlu0 %1627
        %v1631 = vunpack.c.l.s4 839922192
        %v1632 = vunpack.c.0.s8 %v1631
        %v1633 = vperm.slane %v1628, %v1632
        %1635 = vset.pattern.permute.xlu0 0
        %1636 = vperm.xlu0 %1635, %v1506
        %v1637 = vpop.permute.xlu0 %1636
        %v1640 = vunpack.c.l.s4 839922192
        %v1641 = vunpack.c.0.s8 %v1640
        %v1642 = vperm.slane %v1637, %v1641
        %1644 = vset.pattern.permute.xlu0 0
        %1645 = vperm.xlu0 %1644, %v1507
        %v1646 = vpop.permute.xlu0 %1645
        %v1649 = vunpack.c.l.s4 839922192
        %v1650 = vunpack.c.0.s8 %v1649
        %v1651 = vperm.slane %v1646, %v1650
        %v1652 = vunpack.c.l.bf16 %v1460
        %v1653 = vunpack.c.l.bf16 %v1461
        %v1654 = vunpack.c.l.bf16 %v1462
        %v1655 = vunpack.c.l.bf16 %v1463
        %v1656 = vunpack.c.l.bf16 %v1464
        %v1657 = vunpack.c.l.bf16 %v1465
        %v1658 = vunpack.c.l.bf16 %v1466
        %v1659 = vunpack.c.l.bf16 %v1467
        %v1660 = vunpack.c.l.bf16 %v1468
        %v1661 = vunpack.c.l.bf16 %v1469
        %v1662 = vunpack.c.l.bf16 %v1470
        %v1663 = vunpack.c.l.bf16 %v1471
        %v1664 = vunpack.c.l.bf16 %v1472
        %v1665 = vunpack.c.l.bf16 %v1473
        %v1666 = vunpack.c.l.bf16 %v1474
        %v1667 = vunpack.c.l.bf16 %v1475
        %v1668 = vunpack.c.l.bf16 %v1516
        %v1669 = vunpack.c.l.bf16 %v1525
        %v1670 = vunpack.c.l.bf16 %v1534
        %v1671 = vunpack.c.l.bf16 %v1543
        %v1672 = vunpack.c.l.bf16 %v1552
        %v1673 = vunpack.c.l.bf16 %v1561
        %v1674 = vunpack.c.l.bf16 %v1570
        %v1675 = vunpack.c.l.bf16 %v1579
        %v1676 = vunpack.c.l.bf16 %v1588
        %v1677 = vunpack.c.l.bf16 %v1597
        %v1678 = vunpack.c.l.bf16 %v1606
        %v1679 = vunpack.c.l.bf16 %v1615
        %v1680 = vunpack.c.l.bf16 %v1624
        %v1681 = vunpack.c.l.bf16 %v1633
        %v1682 = vunpack.c.l.bf16 %v1642
        %v1683 = vunpack.c.l.bf16 %v1651
        %v1684 = vadd.f32 %v1652, %v1668
        %v1685 = vadd.f32 %v1653, %v1669
        %v1686 = vadd.f32 %v1654, %v1670
        %v1687 = vadd.f32 %v1655, %v1671
        %v1688 = vadd.f32 %v1656, %v1672
        %v1689 = vadd.f32 %v1657, %v1673
        %v1690 = vadd.f32 %v1658, %v1674
        %v1691 = vadd.f32 %v1659, %v1675
        %v1692 = vadd.f32 %v1660, %v1676
        %v1693 = vadd.f32 %v1661, %v1677
        %v1694 = vadd.f32 %v1662, %v1678
        %v1695 = vadd.f32 %v1663, %v1679
        %v1696 = vadd.f32 %v1664, %v1680
        %v1697 = vadd.f32 %v1665, %v1681
        %v1698 = vadd.f32 %v1666, %v1682
        %v1699 = vadd.f32 %v1667, %v1683
        %v1700 = vpack.c.bf16 %v1684, %v1684
        %v1701 = vpack.c.bf16 %v1685, %v1685
        %v1702 = vpack.c.bf16 %v1686, %v1686
        %v1703 = vpack.c.bf16 %v1687, %v1687
        %v1704 = vpack.c.bf16 %v1688, %v1688
        %v1705 = vpack.c.bf16 %v1689, %v1689
        %v1706 = vpack.c.bf16 %v1690, %v1690
        %v1707 = vpack.c.bf16 %v1691, %v1691
        %v1708 = vpack.c.bf16 %v1692, %v1692
        %v1709 = vpack.c.bf16 %v1693, %v1693
        %v1710 = vpack.c.bf16 %v1694, %v1694
        %v1711 = vpack.c.bf16 %v1695, %v1695
        %v1712 = vpack.c.bf16 %v1696, %v1696
        %v1713 = vpack.c.bf16 %v1697, %v1697
        %v1714 = vpack.c.bf16 %v1698, %v1698
        %v1715 = vpack.c.bf16 %v1699, %v1699
        %v1716 = vunpack.c.l.bf16 %v1700
        %v1717 = vunpack.c.l.bf16 %v1701
        %v1718 = vunpack.c.l.bf16 %v1702
        %v1719 = vunpack.c.l.bf16 %v1703
        %v1720 = vunpack.c.l.bf16 %v1704
        %v1721 = vunpack.c.l.bf16 %v1705
        %v1722 = vunpack.c.l.bf16 %v1706
        %v1723 = vunpack.c.l.bf16 %v1707
        %v1724 = vunpack.c.l.bf16 %v1708
        %v1725 = vunpack.c.l.bf16 %v1709
        %v1726 = vunpack.c.l.bf16 %v1710
        %v1727 = vunpack.c.l.bf16 %v1711
        %v1728 = vunpack.c.l.bf16 %v1712
        %v1729 = vunpack.c.l.bf16 %v1713
        %v1730 = vunpack.c.l.bf16 %v1714
        %v1731 = vunpack.c.l.bf16 %v1715
        %v1732 = vmul.f32 %v1716, 0.20019531
        %v1733 = vmul.f32 %v1717, 0.20019531
        %v1734 = vmul.f32 %v1718, 0.20019531
        %v1735 = vmul.f32 %v1719, 0.20019531
        %v1736 = vmul.f32 %v1720, 0.20019531
        %v1737 = vmul.f32 %v1721, 0.20019531
        %v1738 = vmul.f32 %v1722, 0.20019531
        %v1739 = vmul.f32 %v1723, 0.20019531
        %v1740 = vmul.f32 %v1724, 0.20019531
        %v1741 = vmul.f32 %v1725, 0.20019531
        %v1742 = vmul.f32 %v1726, 0.20019531
        %v1743 = vmul.f32 %v1727, 0.20019531
        %v1744 = vmul.f32 %v1728, 0.20019531
        %v1745 = vmul.f32 %v1729, 0.20019531
        %v1746 = vmul.f32 %v1730, 0.20019531
        %v1747 = vmul.f32 %v1731, 0.20019531
        %v1748 = vpack.c.bf16 %v1732, %v1732
        %v1749 = vpack.c.bf16 %v1733, %v1733
        %v1750 = vpack.c.bf16 %v1734, %v1734
        %v1751 = vpack.c.bf16 %v1735, %v1735
        %v1752 = vpack.c.bf16 %v1736, %v1736
        %v1753 = vpack.c.bf16 %v1737, %v1737
        %v1754 = vpack.c.bf16 %v1738, %v1738
        %v1755 = vpack.c.bf16 %v1739, %v1739
        %v1756 = vpack.c.bf16 %v1740, %v1740
        %v1757 = vpack.c.bf16 %v1741, %v1741
        %v1758 = vpack.c.bf16 %v1742, %v1742
        %v1759 = vpack.c.bf16 %v1743, %v1743
        %v1760 = vpack.c.bf16 %v1744, %v1744
        %v1761 = vpack.c.bf16 %v1745, %v1745
        %v1762 = vpack.c.bf16 %v1746, %v1746
        %v1763 = vpack.c.bf16 %v1747, %v1747
        %v1764 = vunpack.c.l.bf16 %v1748
        %v1765 = vunpack.c.l.bf16 %v1749
        %v1766 = vunpack.c.l.bf16 %v1750
        %v1767 = vunpack.c.l.bf16 %v1751
        %v1768 = vunpack.c.l.bf16 %v1752
        %v1769 = vunpack.c.l.bf16 %v1753
        %v1770 = vunpack.c.l.bf16 %v1754
        %v1771 = vunpack.c.l.bf16 %v1755
        %v1772 = vunpack.c.l.bf16 %v1756
        %v1773 = vunpack.c.l.bf16 %v1757
        %v1774 = vunpack.c.l.bf16 %v1758
        %v1775 = vunpack.c.l.bf16 %v1759
        %v1776 = vunpack.c.l.bf16 %v1760
        %v1777 = vunpack.c.l.bf16 %v1761
        %v1778 = vunpack.c.l.bf16 %v1762
        %v1779 = vunpack.c.l.bf16 %v1763
        %v1780 = vmax.f32 %v1716, %v1764
        %v1781 = vmax.f32 %v1717, %v1765
        %v1782 = vmax.f32 %v1718, %v1766
        %v1783 = vmax.f32 %v1719, %v1767
        %v1784 = vmax.f32 %v1720, %v1768
        %v1785 = vmax.f32 %v1721, %v1769
        %v1786 = vmax.f32 %v1722, %v1770
        %v1787 = vmax.f32 %v1723, %v1771
        %v1788 = vmax.f32 %v1724, %v1772
        %v1789 = vmax.f32 %v1725, %v1773
        %v1790 = vmax.f32 %v1726, %v1774
        %v1791 = vmax.f32 %v1727, %v1775
        %v1792 = vmax.f32 %v1728, %v1776
        %v1793 = vmax.f32 %v1729, %v1777
        %v1794 = vmax.f32 %v1730, %v1778
        %v1795 = vmax.f32 %v1731, %v1779
        %v1796 = vpack.c.bf16 %v1780, %v1780
        %v1797 = vpack.c.bf16 %v1781, %v1781
        %v1798 = vpack.c.bf16 %v1782, %v1782
        %v1799 = vpack.c.bf16 %v1783, %v1783
        %v1800 = vpack.c.bf16 %v1784, %v1784
        %v1801 = vpack.c.bf16 %v1785, %v1785
        %v1802 = vpack.c.bf16 %v1786, %v1786
        %v1803 = vpack.c.bf16 %v1787, %v1787
        %v1804 = vpack.c.bf16 %v1788, %v1788
        %v1805 = vpack.c.bf16 %v1789, %v1789
        %v1806 = vpack.c.bf16 %v1790, %v1790
        %v1807 = vpack.c.bf16 %v1791, %v1791
        %v1808 = vpack.c.bf16 %v1792, %v1792
        %v1809 = vpack.c.bf16 %v1793, %v1793
        %v1810 = vpack.c.bf16 %v1794, %v1794
        %v1811 = vpack.c.bf16 %v1795, %v1795
        %v1812 = vunpack.c.l.bf16 %v1796
        %v1813 = vunpack.c.l.bf16 %v1797
        %v1814 = vunpack.c.l.bf16 %v1798
        %v1815 = vunpack.c.l.bf16 %v1799
        %v1816 = vunpack.c.l.bf16 %v1800
        %v1817 = vunpack.c.l.bf16 %v1801
        %v1818 = vunpack.c.l.bf16 %v1802
        %v1819 = vunpack.c.l.bf16 %v1803
        %v1820 = vunpack.c.l.bf16 %v1804
        %v1821 = vunpack.c.l.bf16 %v1805
        %v1822 = vunpack.c.l.bf16 %v1806
        %v1823 = vunpack.c.l.bf16 %v1807
        %v1824 = vunpack.c.l.bf16 %v1808
        %v1825 = vunpack.c.l.bf16 %v1809
        %v1826 = vunpack.c.l.bf16 %v1810
        %v1827 = vunpack.c.l.bf16 %v1811
        %v1828 = vld [vmem:[%s5] sm:$0xff]
        %v1829 = vld [vmem:[%s5 + $0x8] sm:$0xff]
        %v1830 = vld [vmem:[%s5 + $0x10] sm:$0xff]
        %v1831 = vld [vmem:[%s5 + $0x18] sm:$0xff]
        %v1832 = vld [vmem:[%s5 + $0x20] sm:$0xff]
        %v1833 = vld [vmem:[%s5 + $0x28] sm:$0xff]
        %v1834 = vld [vmem:[%s5 + $0x30] sm:$0xff]
        %v1835 = vld [vmem:[%s5 + $0x38] sm:$0xff]
        %v1836 = vld [vmem:[%s5 + $0x40] sm:$0xff]
        %v1837 = vld [vmem:[%s5 + $0x48] sm:$0xff]
        %v1838 = vld [vmem:[%s5 + $0x50] sm:$0xff]
        %v1839 = vld [vmem:[%s5 + $0x58] sm:$0xff]
        %v1840 = vld [vmem:[%s5 + $0x60] sm:$0xff]
        %v1841 = vld [vmem:[%s5 + $0x68] sm:$0xff]
        %v1842 = vld [vmem:[%s5 + $0x70] sm:$0xff]
        %v1843 = vld [vmem:[%s5 + $0x78] sm:$0xff]
        %1845 = vset.pattern.permute.xlu0 0
        %1846 = vperm.xlu0 %1845, %v1828
        %v1847 = vpop.permute.xlu0 %1846
        %1850 = vset.pattern.permute.xlu0 0
        %1851 = vperm.xlu0 %1850, %v1829
        %v1852 = vpop.permute.xlu0 %1851
        %1855 = vset.pattern.permute.xlu0 0
        %1856 = vperm.xlu0 %1855, %v1830
        %v1857 = vpop.permute.xlu0 %1856
        %1860 = vset.pattern.permute.xlu0 0
        %1861 = vperm.xlu0 %1860, %v1831
        %v1862 = vpop.permute.xlu0 %1861
        %1865 = vset.pattern.permute.xlu0 0
        %1866 = vperm.xlu0 %1865, %v1832
        %v1867 = vpop.permute.xlu0 %1866
        %1870 = vset.pattern.permute.xlu0 0
        %1871 = vperm.xlu0 %1870, %v1833
        %v1872 = vpop.permute.xlu0 %1871
        %1875 = vset.pattern.permute.xlu0 0
        %1876 = vperm.xlu0 %1875, %v1834
        %v1877 = vpop.permute.xlu0 %1876
        %1880 = vset.pattern.permute.xlu0 0
        %1881 = vperm.xlu0 %1880, %v1835
        %v1882 = vpop.permute.xlu0 %1881
        %1885 = vset.pattern.permute.xlu0 0
        %1886 = vperm.xlu0 %1885, %v1836
        %v1887 = vpop.permute.xlu0 %1886
        %1890 = vset.pattern.permute.xlu0 0
        %1891 = vperm.xlu0 %1890, %v1837
        %v1892 = vpop.permute.xlu0 %1891
        %1895 = vset.pattern.permute.xlu0 0
        %1896 = vperm.xlu0 %1895, %v1838
        %v1897 = vpop.permute.xlu0 %1896
        %1900 = vset.pattern.permute.xlu0 0
        %1901 = vperm.xlu0 %1900, %v1839
        %v1902 = vpop.permute.xlu0 %1901
        %1905 = vset.pattern.permute.xlu0 0
        %1906 = vperm.xlu0 %1905, %v1840
        %v1907 = vpop.permute.xlu0 %1906
        %1910 = vset.pattern.permute.xlu0 0
        %1911 = vperm.xlu0 %1910, %v1841
        %v1912 = vpop.permute.xlu0 %1911
        %1915 = vset.pattern.permute.xlu0 0
        %1916 = vperm.xlu0 %1915, %v1842
        %v1917 = vpop.permute.xlu0 %1916
        %1920 = vset.pattern.permute.xlu0 0
        %1921 = vperm.xlu0 %1920, %v1843
        %v1922 = vpop.permute.xlu0 %1921
        %v1924 = vmul.f32 %v1812, %v1847
        %v1925 = vmul.f32 %v1813, %v1852
        %v1926 = vmul.f32 %v1814, %v1857
        %v1927 = vmul.f32 %v1815, %v1862
        %v1928 = vmul.f32 %v1816, %v1867
        %v1929 = vmul.f32 %v1817, %v1872
        %v1930 = vmul.f32 %v1818, %v1877
        %v1931 = vmul.f32 %v1819, %v1882
        %v1932 = vmul.f32 %v1820, %v1887
        %v1933 = vmul.f32 %v1821, %v1892
        %v1934 = vmul.f32 %v1822, %v1897
        %v1935 = vmul.f32 %v1823, %v1902
        %v1936 = vmul.f32 %v1824, %v1907
        %v1937 = vmul.f32 %v1825, %v1912
        %v1938 = vmul.f32 %v1826, %v1917
        %v1939 = vmul.f32 %v1827, %v1922
        %v1940 = vadd.f32 %v1924, %v1925
        %v1941 = vadd.f32 %v1940, %v1926
        %v1942 = vadd.f32 %v1941, %v1927
        %v1943 = vadd.f32 %v1942, %v1928
        %v1944 = vadd.f32 %v1943, %v1929
        %v1945 = vadd.f32 %v1944, %v1930
        %v1946 = vadd.f32 %v1945, %v1931
        %v1947 = vadd.f32 %v1946, %v1932
        %v1948 = vadd.f32 %v1947, %v1933
        %v1949 = vadd.f32 %v1948, %v1934
        %v1950 = vadd.f32 %v1949, %v1935
        %v1951 = vadd.f32 %v1950, %v1936
        %v1952 = vadd.f32 %v1951, %v1937
        %v1953 = vadd.f32 %v1952, %v1938
        %v1954 = vadd.f32 %v1953, %v1939
        %v1955 = vrot.slane %v1954, 4
        %v1956 = vadd.f32 %v1954, %v1955
        %v1957 = vrot.slane %v1956, 2
        %v1958 = vadd.f32 %v1956, %v1957
        %v1959 = vrot.slane %v1958, 1
        %v1960 = vadd.f32 %v1958, %v1959
        %v1961 = vld [vmem:[#allocation2] sm:$0x1]
        %1963 = vset.pattern.permute.xlu0 0
        %1964 = vperm.xlu0 %1963, %v1961
        %v1965 = vpop.permute.xlu0 %1964
        %v1967 = vperm.slane %v1965, 0
        %v1968 = vadd.f32 %v1960, %v1967
        %1969 = vst [vmem:[%s273] sm:$0x1] %v1968
        %s1970 = sand.u32 %s183, 1
        %s1971 = scalar_lea.sflag [#allocation4], %s1970
        %s1972 = sand.u32 %s183, 1
        %s1973 = scalar_lea.vmem [#allocation3], %s1972
        // Predicated region
        $region49: #{tpu_custom_call.1} parent=47 // pred_check
          %p1974 = pneg %p193
        $region50: #{tpu_custom_call.1} parent=47 // pred_check_branch
          %1976 = sbr.rel (%p1974) target = $region52
        $region51: #{tpu_custom_call.1} parent=47 // pred_region
          %1978 = vsyncadd %s1971, 0
          %s1979 = scalar_lea.hbm %s7, %s23
          %s1981 = sshll.u32 %s1973, 4
          %s1982 = int_to_ptr.vmem [resolvable:$true] %s1981
          %s1983 = sshll.u32 %s1979, 4
          %s1984 = int_to_ptr.hbm [resolvable:$true] %s1983
          %1986 = dma.vmem_to_hbm [thread:$0]  %s1982, 16, %s1984, %s1971
        $region52: #{tpu_custom_call.1} parent=47 // pred_fallthru
          _
      $region48: #{tpu_custom_call.1} parent=5 // pred_fallthru
        _
      %p1987 = scmp.le.s32.totalorder 2, %s18
      // Predicated region
      $region53: #{tpu_custom_call.1} parent=5 // pred_check
        %p1988 = pneg %p1987
      $region54: #{tpu_custom_call.1} parent=5 // pred_check_branch
        %1990 = sbr.rel (%p1988) target = $region56
      $region55: #{tpu_custom_call.1} parent=5 // pred_region
        %s1991 = ssub.s32 %s18, 2
        // Predicated region
        $region57: #{tpu_custom_call.1} parent=55 // pred_check
          %p1992 = pneg %p199
        $region58: #{tpu_custom_call.1} parent=55 // pred_check_branch
          %1994 = sbr.rel (%p1992) target = $region60
        $region59: #{tpu_custom_call.1} parent=55 // pred_region
          %s1995 = sand.u32 %s184, 1
          %s1996 = scalar_lea.sflag [#allocation4], %s1995
          %s1997 = sand.u32 %s184, 1
          %s1998 = scalar_lea.vmem [#allocation3], %s1997
          %2000 = dma.done %s1996, 16
        $region60: #{tpu_custom_call.1} parent=55 // pred_fallthru
          _
      $region56: #{tpu_custom_call.1} parent=5 // pred_fallthru
        _
    $region6: #{tpu_custom_call.1} parent=1 // loop_footer
      %s22 = sadd.s32 1, %s18
    $region7: #{tpu_custom_call.1} parent=1 // loop_footer_branch
      %17 = sbr.rel target = $region3
    $region8: #{tpu_custom_call.1} parent=1 // loop_exit
      _
    %2001 = vsyncpa [#allocation4], 1
    %s2002 = scalar_lea.sflag [#allocation4], 1
    %2003 = vsyncpa %s2002, 1

</llo_original>
